<compile_context>
chip_gen: v7x
topology: tpu7x:2x2x1
jax: 0.10.0
libtpu: 0.0.40
codegen_flags: <defaults>
</compile_context>

<pallas_src>
import jax
import jax.numpy as jnp
from jax.experimental import pallas as pl
from jax.experimental.pallas import tpu as pltpu

_EPS = 1e-5
_GELU_C = 0.7978845608028654  # sqrt(2/pi)


def _gelu(z):
    # TODO(synk): nn.GELU() default is the exact erf form; tanh approximation
    # used for guaranteed Mosaic lowering (~1e-3 deviation).
    return 0.5 * z * (1.0 + jnp.tanh(_GELU_C * (z + 0.044715 * z * z * z)))


def _sigmoid(z):
    # exact identity; tanh goes to the EUP.
    return 0.5 * (1.0 + jnp.tanh(0.5 * z))


def _dot(a_f32, w_bf16):
    # bf16 x bf16 MXU matmul, f32 accumulation.
    return jnp.dot(a_f32.astype(jnp.bfloat16), w_bf16,
                   preferred_element_type=jnp.float32)


def _make_kernel(*, p, softmax, relu, up, batch, source_dim, tm, phase_ids):
    has_mask = p > 0.0
    n_prm = (4 if relu else 2) + ((4 if relu else 2) if up else 0)
    PH_S0 = phase_ids["s0"]
    PH_S1 = phase_ids.get("s1", -1)
    PH_MID = phase_ids.get("mid", -1)
    PH_FIN = phase_ids["final"]
    need_mid = "mid" in phase_ids
    inv_elems = 1.0 / float(batch * source_dim)   # MSELoss 'mean' normalizer

    def kernel(*refs):
        i = 0
        x_ref = refs[i]; i += 1
        mask_ref = None
        if has_mask:
            mask_ref = refs[i]; i += 1
        prm = refs[i:i + n_prm]; i += n_prm
        d_x_ref = refs[i]; i += 1
        mse_ref = None
        if up:
            mse_ref = refs[i]; i += 1
        scr = list(refs[i:])

        def pop2():
            a, b = scr[0], scr[1]
            del scr[:2]
            return a, b

        s0_mean, s0_m2 = pop2()                      # bn_s
        s1_mean = s1_m2 = st_mean = st_m2 = s3_mean = s3_m2 = None
        if relu:
            s1_mean, s1_m2 = pop2()                  # BN inside down_sampling
        if not softmax:
            st_mean, st_m2 = pop2()                  # bn_t
        if up and relu:
            s3_mean, s3_m2 = pop2()                  # BN inside up_sampling

        phase = pl.program_id(0)
        tile = pl.program_id(1)
        n_tiles = pl.num_programs(1)
        last_tile = tile == n_tiles - 1
        first_tile = tile == 0

        # ---- streaming per-feature Welford (chunk merge across batch tiles).
        def wf_acc(z, mean_ref, m2_ref):
            mu_t = jnp.mean(z, axis=0, keepdims=True)
            m2_t = jnp.sum(jnp.square(z - mu_t), axis=0, keepdims=True)
            mean_old = jnp.where(first_tile, 0.0, mean_ref[...])
            m2_old = jnp.where(first_tile, 0.0, m2_ref[...])
            n = (tile * tm).astype(jnp.float32)
            m = jnp.float32(tm)
            tot = n + m
            delta = mu_t - mean_old
            mean_ref[...] = mean_old + delta * (m / tot)
            m2_ref[...] = m2_old + m2_t + jnp.square(delta) * (n * m / tot)

        def wf_fin(mean_ref, m2_ref):
            # biased variance, exactly like training-mode BatchNorm1d.
            var = m2_ref[...] * jnp.float32(1.0 / batch)
            m2_ref[...] = jax.lax.rsqrt(var + _EPS)   # slot reused as rstd

        def bn(z, mean_ref, rstd_ref):
            return (z - mean_ref[...]) * rstd_ref[...]

        # ---- forward chain, recomputed per phase.  Weights read lazily.
        def z0():
            x = x_ref[...]
            if has_mask:
                return x * mask_ref[...]      # mask already holds {0, 1/(1-p)}
            return x

        def a1():  # first down Linear output (Relu branch only)
            return _dot(bn(z0(), s0_mean, s0_m2), prm[0][...]) + prm[1][...]

        def down():
            if relu:
                h1 = _gelu(bn(a1(), s1_mean, s1_m2))
                return _dot(h1, prm[2][...]) + prm[3][...]
            return _dot(bn(z0(), s0_mean, s0_m2), prm[0][...]) + prm[1][...]

        def softmax_rows(d):
            e = jnp.exp(d - jnp.max(d, axis=1, keepdims=True))
            return e / jnp.sum(e, axis=1, keepdims=True)

        def up_in(d):
            return softmax_rows(d) if softmax else d

        up_base = 4 if relu else 2

        def a3(d):  # first up Linear output
            return _dot(up_in(d), prm[up_base][...]) + prm[up_base + 1][...]

        def up_out(d):
            if relu:
                h3 = _gelu(bn(a3(d), s3_mean, s3_m2))
                return _dot(h3, prm[up_base + 2][...]) + prm[up_base + 3][...]
            return a3(d)

        # ---- phase S0: bn_s statistics over dropout(x)
        @pl.when(phase == PH_S0)
        def _():
            wf_acc(z0(), s0_mean, s0_m2)

        @pl.when((phase == PH_S0) & last_tile)
        def _():
            wf_fin(s0_mean, s0_m2)

        # ---- phase S1 (Relu): statistics of the first down Linear output
        if relu:
            @pl.when(phase == PH_S1)
            def _():
                wf_acc(a1(), s1_mean, s1_m2)

            @pl.when((phase == PH_S1) & last_tile)
            def _():
                wf_fin(s1_mean, s1_m2)

        # ---- mid phase: statistics that depend on the down output d
        if need_mid:
            @pl.when(phase == PH_MID)
            def _():
                d = down()
                if not softmax:
                    wf_acc(d, st_mean, st_m2)          # bn_t
                if up and relu:
                    wf_acc(a3(d), s3_mean, s3_m2)      # up_sampling BN

            @pl.when((phase == PH_MID) & last_tile)
            def _():
                if not softmax:
                    wf_fin(st_mean, st_m2)
                if up and relu:
                    wf_fin(s3_mean, s3_m2)

        # ---- final phase: apply everything, write outputs
        @pl.when(phase == PH_FIN)
        def _():
            d = down()
            if softmax:
                d_x = softmax_rows(d)
            else:
                d_x = _sigmoid(bn(d, st_mean, st_m2))
            d_x_ref[...] = d_x.astype(d_x_ref.dtype)
            if up:
                u = up_out(d)                          # up_sampling(d or softmax(d))
                sq = jnp.square(u - x_ref[...])
                contrib = jnp.sum(jnp.sum(sq, axis=1, keepdims=True),
                                  axis=0, keepdims=True) * jnp.float32(inv_elems)
                prev = jnp.where(first_tile, 0.0, mse_ref[...])
                mse_ref[...] = (prev + contrib).astype(mse_ref.dtype)

    return kernel


def _pick_tile_rows(batch, requested):
    if batch <= 8:
        return batch
    for t in range(min(requested, batch), 7, -1):
        if batch % t == 0 and t % 8 == 0:
            return t
    return batch


def info_distillation_forward(x, params, *, p, softmax, relu, up,
                              dropout_mask=None, tile_rows=256):
    """params: list of (weight(in,out), bias(1,out)) pairs in module order."""
    batch, source_dim = x.shape
    target_dim = params[1][0].shape[1] if relu else params[0][0].shape[1]
    hidden = params[0][0].shape[1] if relu else 0

    tm = _pick_tile_rows(batch, tile_rows)
    n_tiles = batch // tm

    phase_ids = {"s0": 0}
    nph = 1
    if relu:
        phase_ids["s1"] = nph; nph += 1
    if (not softmax) or (up and relu):
        phase_ids["mid"] = nph; nph += 1
    phase_ids["final"] = nph; nph += 1
    num_phases = nph

    flat = []
    for w, b in params:
        flat.append(w.astype(jnp.bfloat16))   # MXU operand
        flat.append(b.astype(jnp.float32))    # added to f32 accumulator

    has_mask = p > 0.0
    args = [x.astype(jnp.float32)]
    in_specs = [pl.BlockSpec((tm, source_dim), lambda ph, t: (t, 0))]
    if has_mask:
        if dropout_mask is None:
            raise ValueError("p > 0 requires dropout_mask with values {0, 1/(1-p)}")
        args.append(dropout_mask.astype(jnp.float32))
        in_specs.append(pl.BlockSpec((tm, source_dim), lambda ph, t: (t, 0)))
    args.extend(flat)
    # Weights/biases: constant index_map -> fetched once, resident in VMEM.
    in_specs.extend(pl.BlockSpec(a.shape, lambda ph, t: (0, 0)) for a in flat)

    out_shapes = [jax.ShapeDtypeStruct((batch, target_dim), jnp.float32)]
    out_specs = [pl.BlockSpec((tm, target_dim), lambda ph, t: (t, 0))]
    if up:
        out_shapes.append(jax.ShapeDtypeStruct((1, 1), jnp.float32))
        out_specs.append(pl.BlockSpec((1, 1), lambda ph, t: (0, 0)))

    scratch = [pltpu.VMEM((1, source_dim), jnp.float32)] * 2
    if relu:
        scratch += [pltpu.VMEM((1, hidden), jnp.float32)] * 2
    if not softmax:
        scratch += [pltpu.VMEM((1, target_dim), jnp.float32)] * 2
    if up and relu:
        scratch += [pltpu.VMEM((1, hidden), jnp.float32)] * 2

    kernel = _make_kernel(p=p, softmax=softmax, relu=relu, up=up,
                          batch=batch, source_dim=source_dim, tm=tm,
                          phase_ids=phase_ids)

    res = pl.pallas_call(
        kernel,
        out_shape=tuple(out_shapes),
        grid_spec=pltpu.PrefetchScalarGridSpec(
            num_scalar_prefetch=0,
            grid=(num_phases, n_tiles),
            in_specs=in_specs,
            out_specs=tuple(out_specs),
            scratch_shapes=scratch),
        compiler_params=pltpu.CompilerParams(
            dimension_semantics=("arbitrary", "arbitrary"),
            vmem_limit_bytes=64 * 1024 * 1024),
    )(*args)

    d_x = res[0]
    if up:
        return d_x, res[1][0, 0]
    return d_x, None


def _reference_forward(x, params, mask, *, p, softmax, relu, up):
    """Pure-JAX reference with the same numerics (bf16 matmul, tanh GELU)."""
    def bn(z):
        m = jnp.mean(z, axis=0, keepdims=True)
        v = jnp.mean(jnp.square(z - m), axis=0, keepdims=True)
        return (z - m) * jax.lax.rsqrt(v + _EPS)

    def lin(z, wb):
        w, b = wb
        return _dot(z, w.astype(jnp.bfloat16)) + b

    h = x * mask if p > 0.0 else x
    h = bn(h)
    if relu:
        d = lin(_gelu(bn(lin(h, params[0]))), params[1]); nxt = 2
    else:
        d = lin(h, params[0]); nxt = 1
    if softmax:
        d_x = jax.nn.softmax(d, axis=1)
        out, uin = d_x, d_x
    else:
        out, uin = _sigmoid(bn(d)), d
    mse = None
    if up:
        if relu:
            u = lin(_gelu(bn(lin(uin, params[nxt]))), params[nxt + 1])
        else:
            u = lin(uin, params[nxt])
        mse = jnp.mean(jnp.square(u - x))
    return out, mse


def init_params(key, source_dim, target_dim, relu, up):
    """Deterministic nn.Linear-style init; weights (in, out), bias (1, out)."""
    hidden = source_dim // 2

    def linear(k, fan_in, fan_out):
        kw, kb = jax.random.split(k)
        bound = 1.0 / (fan_in ** 0.5)
        w = jax.random.uniform(kw, (fan_in, fan_out), jnp.float32, -bound, bound)
        b = jax.random.uniform(kb, (1, fan_out), jnp.float32, -bound, bound)
        return (w, b)

    keys = jax.random.split(key, 4)
    prm = []
    if relu:
        prm.append(linear(keys[0], source_dim, hidden))
        prm.append(linear(keys[1], hidden, target_dim))
        if up:
            prm.append(linear(keys[2], target_dim, hidden))
            prm.append(linear(keys[3], hidden, source_dim))
    else:
        prm.append(linear(keys[0], source_dim, target_dim))
        if up:
            prm.append(linear(keys[1], target_dim, source_dim))
    return prm


if __name__ == "__main__":
    # Small, lane-dense demo shapes (feature dims multiples of 128, batch of 8).
    batch, source_dim, target_dim, p = 64, 256, 128, 0.1
    relu, up = True, True

    key = jax.random.PRNGKey(0)
    kx, kp, km = jax.random.split(key, 3)
    x = jax.random.normal(kx, (batch, source_dim), jnp.float32)
    params = init_params(kp, source_dim, target_dim, relu, up)
    # Host-side inverted-dropout mask {0, 1/(1-p)}, shared with the reference.
    keep = jax.random.bernoulli(km, 1.0 - p, (batch, source_dim))
    mask = keep.astype(jnp.float32) / (1.0 - p)

    for use_softmax in (False, True):
        # tile_rows=16 -> 4 batch tiles, exercising the streaming-stats path.
        d_x, mse = info_distillation_forward(
            x, params, p=p, softmax=use_softmax, relu=relu, up=up,
            dropout_mask=mask, tile_rows=16)
        jax.block_until_ready((d_x, mse))
        ref_dx, ref_mse = _reference_forward(
            x, params, mask, p=p, softmax=use_softmax, relu=relu, up=up)

        assert d_x.shape == (batch, target_dim) and d_x.dtype == jnp.float32
        assert bool(jnp.all(jnp.isfinite(d_x))) and bool(jnp.isfinite(mse))
        assert bool(jnp.allclose(d_x, ref_dx, atol=1e-2, rtol=1e-2))
        assert bool(jnp.allclose(mse, ref_mse, atol=1e-2, rtol=2e-2))
        if use_softmax:
            assert bool(jnp.allclose(jnp.sum(d_x, axis=1), 1.0, atol=2e-3))
        else:
            assert bool(jnp.all(d_x > 0.0)) and bool(jnp.all(d_x < 1.0))

    print("KERNEL_OK")
</pallas_src>

<mosaic_0001>
module attributes {stable_mosaic.version = 11 : i64} {
  func.func @kernel(%arg0: i32, %arg1: i32, %arg2: memref<16x256xf32, #tpu.memory_space<vmem>>, %arg3: memref<16x256xf32, #tpu.memory_space<vmem>>, %arg4: memref<256x128xbf16, #tpu.memory_space<vmem>>, %arg5: memref<1x128xf32, #tpu.memory_space<vmem>>, %arg6: memref<128x128xbf16, #tpu.memory_space<vmem>>, %arg7: memref<1x128xf32, #tpu.memory_space<vmem>>, %arg8: memref<128x128xbf16, #tpu.memory_space<vmem>>, %arg9: memref<1x128xf32, #tpu.memory_space<vmem>>, %arg10: memref<128x256xbf16, #tpu.memory_space<vmem>>, %arg11: memref<1x256xf32, #tpu.memory_space<vmem>>, %arg12: memref<16x128xf32, #tpu.memory_space<vmem>>, %arg13: memref<1x1xf32, #tpu.memory_space<vmem>>, %arg14: memref<1x256xf32, #tpu.memory_space<vmem>>, %arg15: memref<1x256xf32, #tpu.memory_space<vmem>>, %arg16: memref<1x128xf32, #tpu.memory_space<vmem>>, %arg17: memref<1x128xf32, #tpu.memory_space<vmem>>, %arg18: memref<1x128xf32, #tpu.memory_space<vmem>>, %arg19: memref<1x128xf32, #tpu.memory_space<vmem>>, %arg20: memref<1x128xf32, #tpu.memory_space<vmem>>, %arg21: memref<1x128xf32, #tpu.memory_space<vmem>>) attributes {dimension_semantics = [#tpu.dimension_semantics<arbitrary>, #tpu.dimension_semantics<arbitrary>], iteration_bounds = array<i64: 4, 4>, scalar_prefetch = 0 : i64, scratch_operands = 8 : i64, tpu.core_type = #tpu.core_type<tc>, window_params = [{transform_indices = @transform_0, window_bounds = array<i64: 16, 256>}, {transform_indices = @transform_1, window_bounds = array<i64: 16, 256>}, {pipeline_mode = #tpu.pipeline_mode<synchronous>, transform_indices = @transform_2, window_bounds = array<i64: 256, 128>}, {pipeline_mode = #tpu.pipeline_mode<synchronous>, transform_indices = @transform_3, window_bounds = array<i64: 1, 128>}, {pipeline_mode = #tpu.pipeline_mode<synchronous>, transform_indices = @transform_4, window_bounds = array<i64: 128, 128>}, {pipeline_mode = #tpu.pipeline_mode<synchronous>, transform_indices = @transform_5, window_bounds = array<i64: 1, 128>}, {pipeline_mode = #tpu.pipeline_mode<synchronous>, transform_indices = @transform_6, window_bounds = array<i64: 128, 128>}, {pipeline_mode = #tpu.pipeline_mode<synchronous>, transform_indices = @transform_7, window_bounds = array<i64: 1, 128>}, {pipeline_mode = #tpu.pipeline_mode<synchronous>, transform_indices = @transform_8, window_bounds = array<i64: 128, 256>}, {pipeline_mode = #tpu.pipeline_mode<synchronous>, transform_indices = @transform_9, window_bounds = array<i64: 1, 256>}, {transform_indices = @transform_10, window_bounds = array<i64: 16, 128>}, {pipeline_mode = #tpu.pipeline_mode<synchronous>, transform_indices = @transform_11, window_bounds = array<i64: 1, 1>}]} {
    %c3_i32 = arith.constant 3 : i32
    %0 = arith.cmpi eq, %arg1, %c3_i32 : i32
    %c0_i32 = arith.constant 0 : i32
    %1 = arith.cmpi eq, %arg1, %c0_i32 : i32
    %c0_i32_0 = arith.constant 0 : i32
    %2 = arith.cmpi eq, %arg0, %c0_i32_0 : i32
    %3 = arith.extui %2 : i1 to i32
    %c0_i32_1 = arith.constant 0 : i32
    %4 = arith.cmpi ne, %3, %c0_i32_1 : i32
    scf.if %4 {
      %c0 = arith.constant 0 : index
      %c0_12 = arith.constant 0 : index
      %26 = vector.load %arg2[%c0, %c0_12] : memref<16x256xf32, #tpu.memory_space<vmem>>, vector<16x256xf32>
      %c0_13 = arith.constant 0 : index
      %c0_14 = arith.constant 0 : index
      %27 = vector.load %arg3[%c0_13, %c0_14] : memref<16x256xf32, #tpu.memory_space<vmem>>, vector<16x256xf32>
      %28 = arith.mulf %26, %27 : vector<16x256xf32>
      %cst = arith.constant dense<0.000000e+00> : vector<256xf32>
      %29 = vector.multi_reduction <add>, %28, %cst [0] : vector<16x256xf32> to vector<256xf32>
      %30 = vector.shape_cast %29 : vector<256xf32> to vector<1x256xf32>
      %cst_15 = arith.constant 1.600000e+01 : f32
      %31 = vector.broadcast %cst_15 : f32 to vector<1x256xf32>
      %32 = arith.divf %30, %31 : vector<1x256xf32>
      %33 = vector.broadcast %32 : vector<1x256xf32> to vector<16x256xf32>
      %34 = arith.subf %28, %33 : vector<16x256xf32>
      %35 = arith.mulf %34, %34 : vector<16x256xf32>
      %cst_16 = arith.constant dense<0.000000e+00> : vector<256xf32>
      %36 = vector.multi_reduction <add>, %35, %cst_16 [0] : vector<16x256xf32> to vector<256xf32>
      %37 = vector.shape_cast %36 : vector<256xf32> to vector<1x256xf32>
      %c0_17 = arith.constant 0 : index
      %c0_18 = arith.constant 0 : index
      %38 = vector.load %arg14[%c0_17, %c0_18] : memref<1x256xf32, #tpu.memory_space<vmem>>, vector<1x256xf32>
      %cst_19 = arith.constant 0.000000e+00 : f32
      %39 = vector.broadcast %cst_19 : f32 to vector<1x256xf32>
      %40 = arith.select %1, %39, %38 : vector<1x256xf32>
      %c0_20 = arith.constant 0 : index
      %c0_21 = arith.constant 0 : index
      %41 = vector.load %arg15[%c0_20, %c0_21] : memref<1x256xf32, #tpu.memory_space<vmem>>, vector<1x256xf32>
      %cst_22 = arith.constant 0.000000e+00 : f32
      %42 = vector.broadcast %cst_22 : f32 to vector<1x256xf32>
      %43 = arith.select %1, %42, %41 : vector<1x256xf32>
      %c16_i32 = arith.constant 16 : i32
      %44 = arith.muli %arg1, %c16_i32 : i32
      %45 = arith.sitofp %44 : i32 to f32
      %cst_23 = arith.constant 1.600000e+01 : f32
      %46 = arith.addf %45, %cst_23 : f32
      %47 = arith.subf %32, %40 : vector<1x256xf32>
      %cst_24 = arith.constant 1.600000e+01 : f32
      %48 = arith.divf %cst_24, %46 : f32
      %49 = vector.broadcast %48 : f32 to vector<1x256xf32>
      %50 = arith.mulf %47, %49 : vector<1x256xf32>
      %51 = arith.addf %40, %50 : vector<1x256xf32>
      %c0_25 = arith.constant 0 : index
      %c0_26 = arith.constant 0 : index
      %52 = vector.load %arg14[%c0_25, %c0_26] : memref<1x256xf32, #tpu.memory_space<vmem>>, vector<1x256xf32>
      tpu.vector_store %arg14[%c0_25, %c0_26], %51 {strides = array<i32>} : memref<1x256xf32, #tpu.memory_space<vmem>>, vector<1x256xf32>,
      %53 = arith.addf %43, %37 : vector<1x256xf32>
      %54 = arith.mulf %47, %47 : vector<1x256xf32>
      %cst_27 = arith.constant 1.600000e+01 : f32
      %55 = arith.mulf %45, %cst_27 : f32
      %56 = arith.divf %55, %46 : f32
      %57 = vector.broadcast %56 : f32 to vector<1x256xf32>
      %58 = arith.mulf %54, %57 : vector<1x256xf32>
      %59 = arith.addf %53, %58 : vector<1x256xf32>
      %c0_28 = arith.constant 0 : index
      %c0_29 = arith.constant 0 : index
      %60 = vector.load %arg15[%c0_28, %c0_29] : memref<1x256xf32, #tpu.memory_space<vmem>>, vector<1x256xf32>
      tpu.vector_store %arg15[%c0_28, %c0_29], %59 {strides = array<i32>} : memref<1x256xf32, #tpu.memory_space<vmem>>, vector<1x256xf32>,
    } else {
    }
    %c0_i32_2 = arith.constant 0 : i32
    %5 = arith.cmpi eq, %arg0, %c0_i32_2 : i32
    %6 = arith.andi %5, %0 : i1
    %7 = arith.extui %6 : i1 to i32
    %c0_i32_3 = arith.constant 0 : i32
    %8 = arith.cmpi ne, %7, %c0_i32_3 : i32
    scf.if %8 {
      %c0 = arith.constant 0 : index
      %c0_12 = arith.constant 0 : index
      %26 = vector.load %arg15[%c0, %c0_12] : memref<1x256xf32, #tpu.memory_space<vmem>>, vector<1x256xf32>
      %cst = arith.constant 1.562500e-02 : f32
      %27 = vector.broadcast %cst : f32 to vector<1x256xf32>
      %28 = arith.mulf %26, %27 : vector<1x256xf32>
      %cst_13 = arith.constant 9.99999974E-6 : f32
      %29 = vector.broadcast %cst_13 : f32 to vector<1x256xf32>
      %30 = arith.addf %28, %29 : vector<1x256xf32>
      %31 = math.rsqrt %30 : vector<1x256xf32>
      %c0_14 = arith.constant 0 : index
      %c0_15 = arith.constant 0 : index
      %32 = vector.load %arg15[%c0_14, %c0_15] : memref<1x256xf32, #tpu.memory_space<vmem>>, vector<1x256xf32>
      tpu.vector_store %arg15[%c0_14, %c0_15], %31 {strides = array<i32>} : memref<1x256xf32, #tpu.memory_space<vmem>>, vector<1x256xf32>,
    } else {
    }
    %c1_i32 = arith.constant 1 : i32
    %9 = arith.cmpi eq, %arg0, %c1_i32 : i32
    %10 = arith.extui %9 : i1 to i32
    %c0_i32_4 = arith.constant 0 : i32
    %11 = arith.cmpi ne, %10, %c0_i32_4 : i32
    scf.if %11 {
      %c0 = arith.constant 0 : index
      %c0_12 = arith.constant 0 : index
      %26 = vector.load %arg2[%c0, %c0_12] : memref<16x256xf32, #tpu.memory_space<vmem>>, vector<16x256xf32>
      %c0_13 = arith.constant 0 : index
      %c0_14 = arith.constant 0 : index
      %27 = vector.load %arg3[%c0_13, %c0_14] : memref<16x256xf32, #tpu.memory_space<vmem>>, vector<16x256xf32>
      %28 = arith.mulf %26, %27 : vector<16x256xf32>
      %c0_15 = arith.constant 0 : index
      %c0_16 = arith.constant 0 : index
      %29 = vector.load %arg14[%c0_15, %c0_16] : memref<1x256xf32, #tpu.memory_space<vmem>>, vector<1x256xf32>
      %30 = vector.broadcast %29 : vector<1x256xf32> to vector<16x256xf32>
      %31 = arith.subf %28, %30 : vector<16x256xf32>
      %c0_17 = arith.constant 0 : index
      %c0_18 = arith.constant 0 : index
      %32 = vector.load %arg15[%c0_17, %c0_18] : memref<1x256xf32, #tpu.memory_space<vmem>>, vector<1x256xf32>
      %33 = vector.broadcast %32 : vector<1x256xf32> to vector<16x256xf32>
      %34 = arith.mulf %31, %33 : vector<16x256xf32>
      %c0_19 = arith.constant 0 : index
      %c0_20 = arith.constant 0 : index
      %35 = vector.load %arg4[%c0_19, %c0_20] : memref<256x128xbf16, #tpu.memory_space<vmem>>, vector<256x128xbf16>
      %36 = arith.truncf %34 : vector<16x256xf32> to vector<16x256xbf16>
      %cst = arith.constant dense<0.000000e+00> : vector<16x128xf32>
      %37 = tpu.matmul %36, %35, %cst {dimension_numbers = #tpu.dot_dimension_numbers<[1], [0], [0], [1], [0, 0, 1, 1], [], []>} : vector<16x256xbf16>, vector<256x128xbf16>, vector<16x128xf32> -> vector<16x128xf32>
      %c0_21 = arith.constant 0 : index
      %c0_22 = arith.constant 0 : index
      %38 = vector.load %arg5[%c0_21, %c0_22] : memref<1x128xf32, #tpu.memory_space<vmem>>, vector<1x128xf32>
      %39 = vector.broadcast %38 : vector<1x128xf32> to vector<16x128xf32>
      %40 = arith.addf %37, %39 : vector<16x128xf32>
      %cst_23 = arith.constant dense<0.000000e+00> : vector<128xf32>
      %41 = vector.multi_reduction <add>, %40, %cst_23 [0] : vector<16x128xf32> to vector<128xf32>
      %42 = vector.shape_cast %41 : vector<128xf32> to vector<1x128xf32>
      %cst_24 = arith.constant 1.600000e+01 : f32
      %43 = vector.broadcast %cst_24 : f32 to vector<1x128xf32>
      %44 = arith.divf %42, %43 : vector<1x128xf32>
      %45 = vector.broadcast %44 : vector<1x128xf32> to vector<16x128xf32>
      %46 = arith.subf %40, %45 : vector<16x128xf32>
      %47 = arith.mulf %46, %46 : vector<16x128xf32>
      %cst_25 = arith.constant dense<0.000000e+00> : vector<128xf32>
      %48 = vector.multi_reduction <add>, %47, %cst_25 [0] : vector<16x128xf32> to vector<128xf32>
      %49 = vector.shape_cast %48 : vector<128xf32> to vector<1x128xf32>
      %c0_26 = arith.constant 0 : index
      %c0_27 = arith.constant 0 : index
      %50 = vector.load %arg16[%c0_26, %c0_27] : memref<1x128xf32, #tpu.memory_space<vmem>>, vector<1x128xf32>
      %cst_28 = arith.constant 0.000000e+00 : f32
      %51 = vector.broadcast %cst_28 : f32 to vector<1x128xf32>
      %52 = arith.select %1, %51, %50 : vector<1x128xf32>
      %c0_29 = arith.constant 0 : index
      %c0_30 = arith.constant 0 : index
      %53 = vector.load %arg17[%c0_29, %c0_30] : memref<1x128xf32, #tpu.memory_space<vmem>>, vector<1x128xf32>
      %cst_31 = arith.constant 0.000000e+00 : f32
      %54 = vector.broadcast %cst_31 : f32 to vector<1x128xf32>
      %55 = arith.select %1, %54, %53 : vector<1x128xf32>
      %c16_i32 = arith.constant 16 : i32
      %56 = arith.muli %arg1, %c16_i32 : i32
      %57 = arith.sitofp %56 : i32 to f32
      %cst_32 = arith.constant 1.600000e+01 : f32
      %58 = arith.addf %57, %cst_32 : f32
      %59 = arith.subf %44, %52 : vector<1x128xf32>
      %cst_33 = arith.constant 1.600000e+01 : f32
      %60 = arith.divf %cst_33, %58 : f32
      %61 = vector.broadcast %60 : f32 to vector<1x128xf32>
      %62 = arith.mulf %59, %61 : vector<1x128xf32>
      %63 = arith.addf %52, %62 : vector<1x128xf32>
      %c0_34 = arith.constant 0 : index
      %c0_35 = arith.constant 0 : index
      %64 = vector.load %arg16[%c0_34, %c0_35] : memref<1x128xf32, #tpu.memory_space<vmem>>, vector<1x128xf32>
      tpu.vector_store %arg16[%c0_34, %c0_35], %63 {strides = array<i32>} : memref<1x128xf32, #tpu.memory_space<vmem>>, vector<1x128xf32>,
      %65 = arith.addf %55, %49 : vector<1x128xf32>
      %66 = arith.mulf %59, %59 : vector<1x128xf32>
      %cst_36 = arith.constant 1.600000e+01 : f32
      %67 = arith.mulf %57, %cst_36 : f32
      %68 = arith.divf %67, %58 : f32
      %69 = vector.broadcast %68 : f32 to vector<1x128xf32>
      %70 = arith.mulf %66, %69 : vector<1x128xf32>
      %71 = arith.addf %65, %70 : vector<1x128xf32>
      %c0_37 = arith.constant 0 : index
      %c0_38 = arith.constant 0 : index
      %72 = vector.load %arg17[%c0_37, %c0_38] : memref<1x128xf32, #tpu.memory_space<vmem>>, vector<1x128xf32>
      tpu.vector_store %arg17[%c0_37, %c0_38], %71 {strides = array<i32>} : memref<1x128xf32, #tpu.memory_space<vmem>>, vector<1x128xf32>,
    } else {
    }
    %c1_i32_5 = arith.constant 1 : i32
    %12 = arith.cmpi eq, %arg0, %c1_i32_5 : i32
    %13 = arith.andi %12, %0 : i1
    %14 = arith.extui %13 : i1 to i32
    %c0_i32_6 = arith.constant 0 : i32
    %15 = arith.cmpi ne, %14, %c0_i32_6 : i32
    scf.if %15 {
      %c0 = arith.constant 0 : index
      %c0_12 = arith.constant 0 : index
      %26 = vector.load %arg17[%c0, %c0_12] : memref<1x128xf32, #tpu.memory_space<vmem>>, vector<1x128xf32>
      %cst = arith.constant 1.562500e-02 : f32
      %27 = vector.broadcast %cst : f32 to vector<1x128xf32>
      %28 = arith.mulf %26, %27 : vector<1x128xf32>
      %cst_13 = arith.constant 9.99999974E-6 : f32
      %29 = vector.broadcast %cst_13 : f32 to vector<1x128xf32>
      %30 = arith.addf %28, %29 : vector<1x128xf32>
      %31 = math.rsqrt %30 : vector<1x128xf32>
      %c0_14 = arith.constant 0 : index
      %c0_15 = arith.constant 0 : index
      %32 = vector.load %arg17[%c0_14, %c0_15] : memref<1x128xf32, #tpu.memory_space<vmem>>, vector<1x128xf32>
      tpu.vector_store %arg17[%c0_14, %c0_15], %31 {strides = array<i32>} : memref<1x128xf32, #tpu.memory_space<vmem>>, vector<1x128xf32>,
    } else {
    }
    %c2_i32 = arith.constant 2 : i32
    %16 = arith.cmpi eq, %arg0, %c2_i32 : i32
    %17 = arith.extui %16 : i1 to i32
    %c0_i32_7 = arith.constant 0 : i32
    %18 = arith.cmpi ne, %17, %c0_i32_7 : i32
    scf.if %18 {
      %c0 = arith.constant 0 : index
      %c0_12 = arith.constant 0 : index
      %26 = vector.load %arg2[%c0, %c0_12] : memref<16x256xf32, #tpu.memory_space<vmem>>, vector<16x256xf32>
      %c0_13 = arith.constant 0 : index
      %c0_14 = arith.constant 0 : index
      %27 = vector.load %arg3[%c0_13, %c0_14] : memref<16x256xf32, #tpu.memory_space<vmem>>, vector<16x256xf32>
      %28 = arith.mulf %26, %27 : vector<16x256xf32>
      %c0_15 = arith.constant 0 : index
      %c0_16 = arith.constant 0 : index
      %29 = vector.load %arg14[%c0_15, %c0_16] : memref<1x256xf32, #tpu.memory_space<vmem>>, vector<1x256xf32>
      %30 = vector.broadcast %29 : vector<1x256xf32> to vector<16x256xf32>
      %31 = arith.subf %28, %30 : vector<16x256xf32>
      %c0_17 = arith.constant 0 : index
      %c0_18 = arith.constant 0 : index
      %32 = vector.load %arg15[%c0_17, %c0_18] : memref<1x256xf32, #tpu.memory_space<vmem>>, vector<1x256xf32>
      %33 = vector.broadcast %32 : vector<1x256xf32> to vector<16x256xf32>
      %34 = arith.mulf %31, %33 : vector<16x256xf32>
      %c0_19 = arith.constant 0 : index
      %c0_20 = arith.constant 0 : index
      %35 = vector.load %arg4[%c0_19, %c0_20] : memref<256x128xbf16, #tpu.memory_space<vmem>>, vector<256x128xbf16>
      %36 = arith.truncf %34 : vector<16x256xf32> to vector<16x256xbf16>
      %cst = arith.constant dense<0.000000e+00> : vector<16x128xf32>
      %37 = tpu.matmul %36, %35, %cst {dimension_numbers = #tpu.dot_dimension_numbers<[1], [0], [0], [1], [0, 0, 1, 1], [], []>} : vector<16x256xbf16>, vector<256x128xbf16>, vector<16x128xf32> -> vector<16x128xf32>
      %c0_21 = arith.constant 0 : index
      %c0_22 = arith.constant 0 : index
      %38 = vector.load %arg5[%c0_21, %c0_22] : memref<1x128xf32, #tpu.memory_space<vmem>>, vector<1x128xf32>
      %39 = vector.broadcast %38 : vector<1x128xf32> to vector<16x128xf32>
      %40 = arith.addf %37, %39 : vector<16x128xf32>
      %c0_23 = arith.constant 0 : index
      %c0_24 = arith.constant 0 : index
      %41 = vector.load %arg16[%c0_23, %c0_24] : memref<1x128xf32, #tpu.memory_space<vmem>>, vector<1x128xf32>
      %42 = vector.broadcast %41 : vector<1x128xf32> to vector<16x128xf32>
      %43 = arith.subf %40, %42 : vector<16x128xf32>
      %c0_25 = arith.constant 0 : index
      %c0_26 = arith.constant 0 : index
      %44 = vector.load %arg17[%c0_25, %c0_26] : memref<1x128xf32, #tpu.memory_space<vmem>>, vector<1x128xf32>
      %45 = vector.broadcast %44 : vector<1x128xf32> to vector<16x128xf32>
      %46 = arith.mulf %43, %45 : vector<16x128xf32>
      %cst_27 = arith.constant 5.000000e-01 : f32
      %47 = vector.broadcast %cst_27 : f32 to vector<16x128xf32>
      %48 = arith.mulf %47, %46 : vector<16x128xf32>
      %cst_28 = arith.constant 4.471500e-02 : f32
      %49 = vector.broadcast %cst_28 : f32 to vector<16x128xf32>
      %50 = arith.mulf %49, %46 : vector<16x128xf32>
      %51 = arith.mulf %50, %46 : vector<16x128xf32>
      %52 = arith.mulf %51, %46 : vector<16x128xf32>
      %53 = arith.addf %46, %52 : vector<16x128xf32>
      %cst_29 = arith.constant 0.797884583 : f32
      %54 = vector.broadcast %cst_29 : f32 to vector<16x128xf32>
      %55 = arith.mulf %54, %53 : vector<16x128xf32>
      %56 = math.tanh %55 : vector<16x128xf32>
      %cst_30 = arith.constant 1.000000e+00 : f32
      %57 = vector.broadcast %cst_30 : f32 to vector<16x128xf32>
      %58 = arith.addf %57, %56 : vector<16x128xf32>
      %59 = arith.mulf %48, %58 : vector<16x128xf32>
      %c0_31 = arith.constant 0 : index
      %c0_32 = arith.constant 0 : index
      %60 = vector.load %arg6[%c0_31, %c0_32] : memref<128x128xbf16, #tpu.memory_space<vmem>>, vector<128x128xbf16>
      %61 = arith.truncf %59 : vector<16x128xf32> to vector<16x128xbf16>
      %cst_33 = arith.constant dense<0.000000e+00> : vector<16x128xf32>
      %62 = tpu.matmul %61, %60, %cst_33 {dimension_numbers = #tpu.dot_dimension_numbers<[1], [0], [0], [1], [0, 0, 1, 1], [], []>} : vector<16x128xbf16>, vector<128x128xbf16>, vector<16x128xf32> -> vector<16x128xf32>
      %c0_34 = arith.constant 0 : index
      %c0_35 = arith.constant 0 : index
      %63 = vector.load %arg7[%c0_34, %c0_35] : memref<1x128xf32, #tpu.memory_space<vmem>>, vector<1x128xf32>
      %64 = vector.broadcast %63 : vector<1x128xf32> to vector<16x128xf32>
      %65 = arith.addf %62, %64 : vector<16x128xf32>
      %cst_36 = arith.constant dense<0.000000e+00> : vector<128xf32>
      %66 = vector.multi_reduction <add>, %65, %cst_36 [0] : vector<16x128xf32> to vector<128xf32>
      %67 = vector.shape_cast %66 : vector<128xf32> to vector<1x128xf32>
      %cst_37 = arith.constant 1.600000e+01 : f32
      %68 = vector.broadcast %cst_37 : f32 to vector<1x128xf32>
      %69 = arith.divf %67, %68 : vector<1x128xf32>
      %70 = vector.broadcast %69 : vector<1x128xf32> to vector<16x128xf32>
      %71 = arith.subf %65, %70 : vector<16x128xf32>
      %72 = arith.mulf %71, %71 : vector<16x128xf32>
      %cst_38 = arith.constant dense<0.000000e+00> : vector<128xf32>
      %73 = vector.multi_reduction <add>, %72, %cst_38 [0] : vector<16x128xf32> to vector<128xf32>
      %74 = vector.shape_cast %73 : vector<128xf32> to vector<1x128xf32>
      %c0_39 = arith.constant 0 : index
      %c0_40 = arith.constant 0 : index
      %75 = vector.load %arg18[%c0_39, %c0_40] : memref<1x128xf32, #tpu.memory_space<vmem>>, vector<1x128xf32>
      %cst_41 = arith.constant 0.000000e+00 : f32
      %76 = vector.broadcast %cst_41 : f32 to vector<1x128xf32>
      %77 = arith.select %1, %76, %75 : vector<1x128xf32>
      %c0_42 = arith.constant 0 : index
      %c0_43 = arith.constant 0 : index
      %78 = vector.load %arg19[%c0_42, %c0_43] : memref<1x128xf32, #tpu.memory_space<vmem>>, vector<1x128xf32>
      %cst_44 = arith.constant 0.000000e+00 : f32
      %79 = vector.broadcast %cst_44 : f32 to vector<1x128xf32>
      %80 = arith.select %1, %79, %78 : vector<1x128xf32>
      %c16_i32 = arith.constant 16 : i32
      %81 = arith.muli %arg1, %c16_i32 : i32
      %82 = arith.sitofp %81 : i32 to f32
      %cst_45 = arith.constant 1.600000e+01 : f32
      %83 = arith.addf %82, %cst_45 : f32
      %84 = arith.subf %69, %77 : vector<1x128xf32>
      %cst_46 = arith.constant 1.600000e+01 : f32
      %85 = arith.divf %cst_46, %83 : f32
      %86 = vector.broadcast %85 : f32 to vector<1x128xf32>
      %87 = arith.mulf %84, %86 : vector<1x128xf32>
      %88 = arith.addf %77, %87 : vector<1x128xf32>
      %c0_47 = arith.constant 0 : index
      %c0_48 = arith.constant 0 : index
      %89 = vector.load %arg18[%c0_47, %c0_48] : memref<1x128xf32, #tpu.memory_space<vmem>>, vector<1x128xf32>
      tpu.vector_store %arg18[%c0_47, %c0_48], %88 {strides = array<i32>} : memref<1x128xf32, #tpu.memory_space<vmem>>, vector<1x128xf32>,
      %90 = arith.addf %80, %74 : vector<1x128xf32>
      %91 = arith.mulf %84, %84 : vector<1x128xf32>
      %cst_49 = arith.constant 1.600000e+01 : f32
      %92 = arith.mulf %82, %cst_49 : f32
      %93 = arith.divf %92, %83 : f32
      %94 = vector.broadcast %93 : f32 to vector<1x128xf32>
      %95 = arith.mulf %91, %94 : vector<1x128xf32>
      %96 = arith.addf %90, %95 : vector<1x128xf32>
      %c0_50 = arith.constant 0 : index
      %c0_51 = arith.constant 0 : index
      %97 = vector.load %arg19[%c0_50, %c0_51] : memref<1x128xf32, #tpu.memory_space<vmem>>, vector<1x128xf32>
      tpu.vector_store %arg19[%c0_50, %c0_51], %96 {strides = array<i32>} : memref<1x128xf32, #tpu.memory_space<vmem>>, vector<1x128xf32>,
      %c0_52 = arith.constant 0 : index
      %c0_53 = arith.constant 0 : index
      %98 = vector.load %arg8[%c0_52, %c0_53] : memref<128x128xbf16, #tpu.memory_space<vmem>>, vector<128x128xbf16>
      %99 = arith.truncf %65 : vector<16x128xf32> to vector<16x128xbf16>
      %cst_54 = arith.constant dense<0.000000e+00> : vector<16x128xf32>
      %100 = tpu.matmul %99, %98, %cst_54 {dimension_numbers = #tpu.dot_dimension_numbers<[1], [0], [0], [1], [0, 0, 1, 1], [], []>} : vector<16x128xbf16>, vector<128x128xbf16>, vector<16x128xf32> -> vector<16x128xf32>
      %c0_55 = arith.constant 0 : index
      %c0_56 = arith.constant 0 : index
      %101 = vector.load %arg9[%c0_55, %c0_56] : memref<1x128xf32, #tpu.memory_space<vmem>>, vector<1x128xf32>
      %102 = vector.broadcast %101 : vector<1x128xf32> to vector<16x128xf32>
      %103 = arith.addf %100, %102 : vector<16x128xf32>
      %cst_57 = arith.constant dense<0.000000e+00> : vector<128xf32>
      %104 = vector.multi_reduction <add>, %103, %cst_57 [0] : vector<16x128xf32> to vector<128xf32>
      %105 = vector.shape_cast %104 : vector<128xf32> to vector<1x128xf32>
      %cst_58 = arith.constant 1.600000e+01 : f32
      %106 = vector.broadcast %cst_58 : f32 to vector<1x128xf32>
      %107 = arith.divf %105, %106 : vector<1x128xf32>
      %108 = vector.broadcast %107 : vector<1x128xf32> to vector<16x128xf32>
      %109 = arith.subf %103, %108 : vector<16x128xf32>
      %110 = arith.mulf %109, %109 : vector<16x128xf32>
      %cst_59 = arith.constant dense<0.000000e+00> : vector<128xf32>
      %111 = vector.multi_reduction <add>, %110, %cst_59 [0] : vector<16x128xf32> to vector<128xf32>
      %112 = vector.shape_cast %111 : vector<128xf32> to vector<1x128xf32>
      %c0_60 = arith.constant 0 : index
      %c0_61 = arith.constant 0 : index
      %113 = vector.load %arg20[%c0_60, %c0_61] : memref<1x128xf32, #tpu.memory_space<vmem>>, vector<1x128xf32>
      %cst_62 = arith.constant 0.000000e+00 : f32
      %114 = vector.broadcast %cst_62 : f32 to vector<1x128xf32>
      %115 = arith.select %1, %114, %113 : vector<1x128xf32>
      %c0_63 = arith.constant 0 : index
      %c0_64 = arith.constant 0 : index
      %116 = vector.load %arg21[%c0_63, %c0_64] : memref<1x128xf32, #tpu.memory_space<vmem>>, vector<1x128xf32>
      %cst_65 = arith.constant 0.000000e+00 : f32
      %117 = vector.broadcast %cst_65 : f32 to vector<1x128xf32>
      %118 = arith.select %1, %117, %116 : vector<1x128xf32>
      %c16_i32_66 = arith.constant 16 : i32
      %119 = arith.muli %arg1, %c16_i32_66 : i32
      %120 = arith.sitofp %119 : i32 to f32
      %cst_67 = arith.constant 1.600000e+01 : f32
      %121 = arith.addf %120, %cst_67 : f32
      %122 = arith.subf %107, %115 : vector<1x128xf32>
      %cst_68 = arith.constant 1.600000e+01 : f32
      %123 = arith.divf %cst_68, %121 : f32
      %124 = vector.broadcast %123 : f32 to vector<1x128xf32>
      %125 = arith.mulf %122, %124 : vector<1x128xf32>
      %126 = arith.addf %115, %125 : vector<1x128xf32>
      %c0_69 = arith.constant 0 : index
      %c0_70 = arith.constant 0 : index
      %127 = vector.load %arg20[%c0_69, %c0_70] : memref<1x128xf32, #tpu.memory_space<vmem>>, vector<1x128xf32>
      tpu.vector_store %arg20[%c0_69, %c0_70], %126 {strides = array<i32>} : memref<1x128xf32, #tpu.memory_space<vmem>>, vector<1x128xf32>,
      %128 = arith.addf %118, %112 : vector<1x128xf32>
      %129 = arith.mulf %122, %122 : vector<1x128xf32>
      %cst_71 = arith.constant 1.600000e+01 : f32
      %130 = arith.mulf %120, %cst_71 : f32
      %131 = arith.divf %130, %121 : f32
      %132 = vector.broadcast %131 : f32 to vector<1x128xf32>
      %133 = arith.mulf %129, %132 : vector<1x128xf32>
      %134 = arith.addf %128, %133 : vector<1x128xf32>
      %c0_72 = arith.constant 0 : index
      %c0_73 = arith.constant 0 : index
      %135 = vector.load %arg21[%c0_72, %c0_73] : memref<1x128xf32, #tpu.memory_space<vmem>>, vector<1x128xf32>
      tpu.vector_store %arg21[%c0_72, %c0_73], %134 {strides = array<i32>} : memref<1x128xf32, #tpu.memory_space<vmem>>, vector<1x128xf32>,
    } else {
    }
    %c2_i32_8 = arith.constant 2 : i32
    %19 = arith.cmpi eq, %arg0, %c2_i32_8 : i32
    %20 = arith.andi %19, %0 : i1
    %21 = arith.extui %20 : i1 to i32
    %c0_i32_9 = arith.constant 0 : i32
    %22 = arith.cmpi ne, %21, %c0_i32_9 : i32
    scf.if %22 {
      %c0 = arith.constant 0 : index
      %c0_12 = arith.constant 0 : index
      %26 = vector.load %arg19[%c0, %c0_12] : memref<1x128xf32, #tpu.memory_space<vmem>>, vector<1x128xf32>
      %cst = arith.constant 1.562500e-02 : f32
      %27 = vector.broadcast %cst : f32 to vector<1x128xf32>
      %28 = arith.mulf %26, %27 : vector<1x128xf32>
      %cst_13 = arith.constant 9.99999974E-6 : f32
      %29 = vector.broadcast %cst_13 : f32 to vector<1x128xf32>
      %30 = arith.addf %28, %29 : vector<1x128xf32>
      %31 = math.rsqrt %30 : vector<1x128xf32>
      %c0_14 = arith.constant 0 : index
      %c0_15 = arith.constant 0 : index
      %32 = vector.load %arg19[%c0_14, %c0_15] : memref<1x128xf32, #tpu.memory_space<vmem>>, vector<1x128xf32>
      tpu.vector_store %arg19[%c0_14, %c0_15], %31 {strides = array<i32>} : memref<1x128xf32, #tpu.memory_space<vmem>>, vector<1x128xf32>,
      %c0_16 = arith.constant 0 : index
      %c0_17 = arith.constant 0 : index
      %33 = vector.load %arg21[%c0_16, %c0_17] : memref<1x128xf32, #tpu.memory_space<vmem>>, vector<1x128xf32>
      %cst_18 = arith.constant 1.562500e-02 : f32
      %34 = vector.broadcast %cst_18 : f32 to vector<1x128xf32>
      %35 = arith.mulf %33, %34 : vector<1x128xf32>
      %cst_19 = arith.constant 9.99999974E-6 : f32
      %36 = vector.broadcast %cst_19 : f32 to vector<1x128xf32>
      %37 = arith.addf %35, %36 : vector<1x128xf32>
      %38 = math.rsqrt %37 : vector<1x128xf32>
      %c0_20 = arith.constant 0 : index
      %c0_21 = arith.constant 0 : index
      %39 = vector.load %arg21[%c0_20, %c0_21] : memref<1x128xf32, #tpu.memory_space<vmem>>, vector<1x128xf32>
      tpu.vector_store %arg21[%c0_20, %c0_21], %38 {strides = array<i32>} : memref<1x128xf32, #tpu.memory_space<vmem>>, vector<1x128xf32>,
    } else {
    }
    %c3_i32_10 = arith.constant 3 : i32
    %23 = arith.cmpi eq, %arg0, %c3_i32_10 : i32
    %24 = arith.extui %23 : i1 to i32
    %c0_i32_11 = arith.constant 0 : i32
    %25 = arith.cmpi ne, %24, %c0_i32_11 : i32
    scf.if %25 {
      %c0 = arith.constant 0 : index
      %c0_12 = arith.constant 0 : index
      %26 = vector.load %arg2[%c0, %c0_12] : memref<16x256xf32, #tpu.memory_space<vmem>>, vector<16x256xf32>
      %c0_13 = arith.constant 0 : index
      %c0_14 = arith.constant 0 : index
      %27 = vector.load %arg3[%c0_13, %c0_14] : memref<16x256xf32, #tpu.memory_space<vmem>>, vector<16x256xf32>
      %28 = arith.mulf %26, %27 : vector<16x256xf32>
      %c0_15 = arith.constant 0 : index
      %c0_16 = arith.constant 0 : index
      %29 = vector.load %arg14[%c0_15, %c0_16] : memref<1x256xf32, #tpu.memory_space<vmem>>, vector<1x256xf32>
      %30 = vector.broadcast %29 : vector<1x256xf32> to vector<16x256xf32>
      %31 = arith.subf %28, %30 : vector<16x256xf32>
      %c0_17 = arith.constant 0 : index
      %c0_18 = arith.constant 0 : index
      %32 = vector.load %arg15[%c0_17, %c0_18] : memref<1x256xf32, #tpu.memory_space<vmem>>, vector<1x256xf32>
      %33 = vector.broadcast %32 : vector<1x256xf32> to vector<16x256xf32>
      %34 = arith.mulf %31, %33 : vector<16x256xf32>
      %c0_19 = arith.constant 0 : index
      %c0_20 = arith.constant 0 : index
      %35 = vector.load %arg4[%c0_19, %c0_20] : memref<256x128xbf16, #tpu.memory_space<vmem>>, vector<256x128xbf16>
      %36 = arith.truncf %34 : vector<16x256xf32> to vector<16x256xbf16>
      %cst = arith.constant dense<0.000000e+00> : vector<16x128xf32>
      %37 = tpu.matmul %36, %35, %cst {dimension_numbers = #tpu.dot_dimension_numbers<[1], [0], [0], [1], [0, 0, 1, 1], [], []>} : vector<16x256xbf16>, vector<256x128xbf16>, vector<16x128xf32> -> vector<16x128xf32>
      %c0_21 = arith.constant 0 : index
      %c0_22 = arith.constant 0 : index
      %38 = vector.load %arg5[%c0_21, %c0_22] : memref<1x128xf32, #tpu.memory_space<vmem>>, vector<1x128xf32>
      %39 = vector.broadcast %38 : vector<1x128xf32> to vector<16x128xf32>
      %40 = arith.addf %37, %39 : vector<16x128xf32>
      %c0_23 = arith.constant 0 : index
      %c0_24 = arith.constant 0 : index
      %41 = vector.load %arg16[%c0_23, %c0_24] : memref<1x128xf32, #tpu.memory_space<vmem>>, vector<1x128xf32>
      %42 = vector.broadcast %41 : vector<1x128xf32> to vector<16x128xf32>
      %43 = arith.subf %40, %42 : vector<16x128xf32>
      %c0_25 = arith.constant 0 : index
      %c0_26 = arith.constant 0 : index
      %44 = vector.load %arg17[%c0_25, %c0_26] : memref<1x128xf32, #tpu.memory_space<vmem>>, vector<1x128xf32>
      %45 = vector.broadcast %44 : vector<1x128xf32> to vector<16x128xf32>
      %46 = arith.mulf %43, %45 : vector<16x128xf32>
      %cst_27 = arith.constant 5.000000e-01 : f32
      %47 = vector.broadcast %cst_27 : f32 to vector<16x128xf32>
      %48 = arith.mulf %47, %46 : vector<16x128xf32>
      %cst_28 = arith.constant 4.471500e-02 : f32
      %49 = vector.broadcast %cst_28 : f32 to vector<16x128xf32>
      %50 = arith.mulf %49, %46 : vector<16x128xf32>
      %51 = arith.mulf %50, %46 : vector<16x128xf32>
      %52 = arith.mulf %51, %46 : vector<16x128xf32>
      %53 = arith.addf %46, %52 : vector<16x128xf32>
      %cst_29 = arith.constant 0.797884583 : f32
      %54 = vector.broadcast %cst_29 : f32 to vector<16x128xf32>
      %55 = arith.mulf %54, %53 : vector<16x128xf32>
      %56 = math.tanh %55 : vector<16x128xf32>
      %cst_30 = arith.constant 1.000000e+00 : f32
      %57 = vector.broadcast %cst_30 : f32 to vector<16x128xf32>
      %58 = arith.addf %57, %56 : vector<16x128xf32>
      %59 = arith.mulf %48, %58 : vector<16x128xf32>
      %c0_31 = arith.constant 0 : index
      %c0_32 = arith.constant 0 : index
      %60 = vector.load %arg6[%c0_31, %c0_32] : memref<128x128xbf16, #tpu.memory_space<vmem>>, vector<128x128xbf16>
      %61 = arith.truncf %59 : vector<16x128xf32> to vector<16x128xbf16>
      %cst_33 = arith.constant dense<0.000000e+00> : vector<16x128xf32>
      %62 = tpu.matmul %61, %60, %cst_33 {dimension_numbers = #tpu.dot_dimension_numbers<[1], [0], [0], [1], [0, 0, 1, 1], [], []>} : vector<16x128xbf16>, vector<128x128xbf16>, vector<16x128xf32> -> vector<16x128xf32>
      %c0_34 = arith.constant 0 : index
      %c0_35 = arith.constant 0 : index
      %63 = vector.load %arg7[%c0_34, %c0_35] : memref<1x128xf32, #tpu.memory_space<vmem>>, vector<1x128xf32>
      %64 = vector.broadcast %63 : vector<1x128xf32> to vector<16x128xf32>
      %65 = arith.addf %62, %64 : vector<16x128xf32>
      %c0_36 = arith.constant 0 : index
      %c0_37 = arith.constant 0 : index
      %66 = vector.load %arg18[%c0_36, %c0_37] : memref<1x128xf32, #tpu.memory_space<vmem>>, vector<1x128xf32>
      %67 = vector.broadcast %66 : vector<1x128xf32> to vector<16x128xf32>
      %68 = arith.subf %65, %67 : vector<16x128xf32>
      %c0_38 = arith.constant 0 : index
      %c0_39 = arith.constant 0 : index
      %69 = vector.load %arg19[%c0_38, %c0_39] : memref<1x128xf32, #tpu.memory_space<vmem>>, vector<1x128xf32>
      %70 = vector.broadcast %69 : vector<1x128xf32> to vector<16x128xf32>
      %71 = arith.mulf %68, %70 : vector<16x128xf32>
      %cst_40 = arith.constant 5.000000e-01 : f32
      %72 = vector.broadcast %cst_40 : f32 to vector<16x128xf32>
      %73 = arith.mulf %72, %71 : vector<16x128xf32>
      %74 = math.tanh %73 : vector<16x128xf32>
      %cst_41 = arith.constant 1.000000e+00 : f32
      %75 = vector.broadcast %cst_41 : f32 to vector<16x128xf32>
      %76 = arith.addf %75, %74 : vector<16x128xf32>
      %cst_42 = arith.constant 5.000000e-01 : f32
      %77 = vector.broadcast %cst_42 : f32 to vector<16x128xf32>
      %78 = arith.mulf %77, %76 : vector<16x128xf32>
      %c0_43 = arith.constant 0 : index
      %c0_44 = arith.constant 0 : index
      %79 = vector.load %arg12[%c0_43, %c0_44] : memref<16x128xf32, #tpu.memory_space<vmem>>, vector<16x128xf32>
      tpu.vector_store %arg12[%c0_43, %c0_44], %78 {strides = array<i32>} : memref<16x128xf32, #tpu.memory_space<vmem>>, vector<16x128xf32>,
      %c0_45 = arith.constant 0 : index
      %c0_46 = arith.constant 0 : index
      %80 = vector.load %arg8[%c0_45, %c0_46] : memref<128x128xbf16, #tpu.memory_space<vmem>>, vector<128x128xbf16>
      %81 = arith.truncf %65 : vector<16x128xf32> to vector<16x128xbf16>
      %cst_47 = arith.constant dense<0.000000e+00> : vector<16x128xf32>
      %82 = tpu.matmul %81, %80, %cst_47 {dimension_numbers = #tpu.dot_dimension_numbers<[1], [0], [0], [1], [0, 0, 1, 1], [], []>} : vector<16x128xbf16>, vector<128x128xbf16>, vector<16x128xf32> -> vector<16x128xf32>
      %c0_48 = arith.constant 0 : index
      %c0_49 = arith.constant 0 : index
      %83 = vector.load %arg9[%c0_48, %c0_49] : memref<1x128xf32, #tpu.memory_space<vmem>>, vector<1x128xf32>
      %84 = vector.broadcast %83 : vector<1x128xf32> to vector<16x128xf32>
      %85 = arith.addf %82, %84 : vector<16x128xf32>
      %c0_50 = arith.constant 0 : index
      %c0_51 = arith.constant 0 : index
      %86 = vector.load %arg20[%c0_50, %c0_51] : memref<1x128xf32, #tpu.memory_space<vmem>>, vector<1x128xf32>
      %87 = vector.broadcast %86 : vector<1x128xf32> to vector<16x128xf32>
      %88 = arith.subf %85, %87 : vector<16x128xf32>
      %c0_52 = arith.constant 0 : index
      %c0_53 = arith.constant 0 : index
      %89 = vector.load %arg21[%c0_52, %c0_53] : memref<1x128xf32, #tpu.memory_space<vmem>>, vector<1x128xf32>
      %90 = vector.broadcast %89 : vector<1x128xf32> to vector<16x128xf32>
      %91 = arith.mulf %88, %90 : vector<16x128xf32>
      %cst_54 = arith.constant 5.000000e-01 : f32
      %92 = vector.broadcast %cst_54 : f32 to vector<16x128xf32>
      %93 = arith.mulf %92, %91 : vector<16x128xf32>
      %cst_55 = arith.constant 4.471500e-02 : f32
      %94 = vector.broadcast %cst_55 : f32 to vector<16x128xf32>
      %95 = arith.mulf %94, %91 : vector<16x128xf32>
      %96 = arith.mulf %95, %91 : vector<16x128xf32>
      %97 = arith.mulf %96, %91 : vector<16x128xf32>
      %98 = arith.addf %91, %97 : vector<16x128xf32>
      %cst_56 = arith.constant 0.797884583 : f32
      %99 = vector.broadcast %cst_56 : f32 to vector<16x128xf32>
      %100 = arith.mulf %99, %98 : vector<16x128xf32>
      %101 = math.tanh %100 : vector<16x128xf32>
      %cst_57 = arith.constant 1.000000e+00 : f32
      %102 = vector.broadcast %cst_57 : f32 to vector<16x128xf32>
      %103 = arith.addf %102, %101 : vector<16x128xf32>
      %104 = arith.mulf %93, %103 : vector<16x128xf32>
      %c0_58 = arith.constant 0 : index
      %c0_59 = arith.constant 0 : index
      %105 = vector.load %arg10[%c0_58, %c0_59] : memref<128x256xbf16, #tpu.memory_space<vmem>>, vector<128x256xbf16>
      %106 = arith.truncf %104 : vector<16x128xf32> to vector<16x128xbf16>
      %cst_60 = arith.constant dense<0.000000e+00> : vector<16x256xf32>
      %107 = tpu.matmul %106, %105, %cst_60 {dimension_numbers = #tpu.dot_dimension_numbers<[1], [0], [0], [1], [0, 0, 1, 1], [], []>} : vector<16x128xbf16>, vector<128x256xbf16>, vector<16x256xf32> -> vector<16x256xf32>
      %c0_61 = arith.constant 0 : index
      %c0_62 = arith.constant 0 : index
      %108 = vector.load %arg11[%c0_61, %c0_62] : memref<1x256xf32, #tpu.memory_space<vmem>>, vector<1x256xf32>
      %109 = vector.broadcast %108 : vector<1x256xf32> to vector<16x256xf32>
      %110 = arith.addf %107, %109 : vector<16x256xf32>
      %c0_63 = arith.constant 0 : index
      %c0_64 = arith.constant 0 : index
      %111 = vector.load %arg2[%c0_63, %c0_64] : memref<16x256xf32, #tpu.memory_space<vmem>>, vector<16x256xf32>
      %112 = arith.subf %110, %111 : vector<16x256xf32>
      %113 = arith.mulf %112, %112 : vector<16x256xf32>
      %cst_65 = arith.constant dense<0.000000e+00> : vector<16xf32>
      %114 = vector.multi_reduction <add>, %113, %cst_65 [1] : vector<16x256xf32> to vector<16xf32>
      %115 = vector.shape_cast %114 : vector<16xf32> to vector<16x1xf32>
      %cst_66 = arith.constant dense<0.000000e+00> : vector<1xf32>
      %116 = vector.multi_reduction <add>, %115, %cst_66 [0] : vector<16x1xf32> to vector<1xf32>
      %117 = vector.shape_cast %116 : vector<1xf32> to vector<1x1xf32>
      %cst_67 = arith.constant 6.10351563E-5 : f32
      %118 = vector.broadcast %cst_67 : f32 to vector<1x1xf32>
      %119 = arith.mulf %117, %118 : vector<1x1xf32>
      %c0_68 = arith.constant 0 : index
      %c0_69 = arith.constant 0 : index
      %120 = vector.load %arg13[%c0_68, %c0_69] : memref<1x1xf32, #tpu.memory_space<vmem>>, vector<1x1xf32>
      %cst_70 = arith.constant 0.000000e+00 : f32
      %121 = vector.broadcast %cst_70 : f32 to vector<1x1xf32>
      %122 = arith.select %1, %121, %120 : vector<1x1xf32>
      %123 = arith.addf %122, %119 : vector<1x1xf32>
      %c0_71 = arith.constant 0 : index
      %c0_72 = arith.constant 0 : index
      %124 = vector.load %arg13[%c0_71, %c0_72] : memref<1x1xf32, #tpu.memory_space<vmem>>, vector<1x1xf32>
      tpu.vector_store %arg13[%c0_71, %c0_72], %123 {strides = array<i32>} : memref<1x1xf32, #tpu.memory_space<vmem>>, vector<1x1xf32>,
    } else {
    }
    return
  }
  func.func @transform_0(%arg0: i32, %arg1: i32) -> (i32, i32) {
    %c0_i32 = arith.constant 0 : i32
    %c0_i32_0 = arith.constant 0 : i32
    return %arg1, %c0_i32 : i32, i32
  }
  func.func @transform_1(%arg0: i32, %arg1: i32) -> (i32, i32) {
    %c0_i32 = arith.constant 0 : i32
    %c0_i32_0 = arith.constant 0 : i32
    return %arg1, %c0_i32 : i32, i32
  }
  func.func @transform_2(%arg0: i32, %arg1: i32) -> (i32, i32) {
    %c0_i32 = arith.constant 0 : i32
    %c0_i32_0 = arith.constant 0 : i32
    %c0_i32_1 = arith.constant 0 : i32
    return %c0_i32, %c0_i32_0 : i32, i32
  }
  func.func @transform_3(%arg0: i32, %arg1: i32) -> (i32, i32) {
    %c0_i32 = arith.constant 0 : i32
    %c0_i32_0 = arith.constant 0 : i32
    %c0_i32_1 = arith.constant 0 : i32
    return %c0_i32, %c0_i32_0 : i32, i32
  }
  func.func @transform_4(%arg0: i32, %arg1: i32) -> (i32, i32) {
    %c0_i32 = arith.constant 0 : i32
    %c0_i32_0 = arith.constant 0 : i32
    %c0_i32_1 = arith.constant 0 : i32
    return %c0_i32, %c0_i32_0 : i32, i32
  }
  func.func @transform_5(%arg0: i32, %arg1: i32) -> (i32, i32) {
    %c0_i32 = arith.constant 0 : i32
    %c0_i32_0 = arith.constant 0 : i32
    %c0_i32_1 = arith.constant 0 : i32
    return %c0_i32, %c0_i32_0 : i32, i32
  }
  func.func @transform_6(%arg0: i32, %arg1: i32) -> (i32, i32) {
    %c0_i32 = arith.constant 0 : i32
    %c0_i32_0 = arith.constant 0 : i32
    %c0_i32_1 = arith.constant 0 : i32
    return %c0_i32, %c0_i32_0 : i32, i32
  }
  func.func @transform_7(%arg0: i32, %arg1: i32) -> (i32, i32) {
    %c0_i32 = arith.constant 0 : i32
    %c0_i32_0 = arith.constant 0 : i32
    %c0_i32_1 = arith.constant 0 : i32
    return %c0_i32, %c0_i32_0 : i32, i32
  }
  func.func @transform_8(%arg0: i32, %arg1: i32) -> (i32, i32) {
    %c0_i32 = arith.constant 0 : i32
    %c0_i32_0 = arith.constant 0 : i32
    %c0_i32_1 = arith.constant 0 : i32
    return %c0_i32, %c0_i32_0 : i32, i32
  }
  func.func @transform_9(%arg0: i32, %arg1: i32) -> (i32, i32) {
    %c0_i32 = arith.constant 0 : i32
    %c0_i32_0 = arith.constant 0 : i32
    %c0_i32_1 = arith.constant 0 : i32
    return %c0_i32, %c0_i32_0 : i32, i32
  }
  func.func @transform_10(%arg0: i32, %arg1: i32) -> (i32, i32) {
    %c0_i32 = arith.constant 0 : i32
    %c0_i32_0 = arith.constant 0 : i32
    return %arg1, %c0_i32 : i32, i32
  }
  func.func @transform_11(%arg0: i32, %arg1: i32) -> (i32, i32) {
    %c0_i32 = arith.constant 0 : i32
    %c0_i32_0 = arith.constant 0 : i32
    %c0_i32_1 = arith.constant 0 : i32
    return %c0_i32, %c0_i32_0 : i32, i32
  }
}

</mosaic_0001>

<llo_original>
// kernel: tpu_custom_call.1
$region0: #{tpu_custom_call.1}
  #allocation0 [shape = 'u32[]', space=smem, size = 0x4, offset = 0x4, fixed_abs, tag = 'smem constant byte address 0x4 - core index']
  #allocation1 [shape = 'u32[144,128]{1,0:T(1,128)}', space=vmem, size = 0x12000, scoped, tag = 'internal scratch']
  #allocation2 [shape = 'f32[1,256]{1,0:T(1,128)}', space=vmem, size = 0x400, scoped, tag = 'scratch operand']
  #allocation3 [shape = 'f32[1,256]{1,0:T(1,128)}', space=vmem, size = 0x400, scoped, tag = 'scratch operand']
  #allocation4 [shape = 'f32[1,128]{1,0:T(1,128)}', space=vmem, size = 0x200, scoped, tag = 'scratch operand']
  #allocation5 [shape = 'f32[1,128]{1,0:T(1,128)}', space=vmem, size = 0x200, scoped, tag = 'scratch operand']
  #allocation6 [shape = 'f32[1,128]{1,0:T(1,128)}', space=vmem, size = 0x200, scoped, tag = 'scratch operand']
  #allocation7 [shape = 'f32[1,128]{1,0:T(1,128)}', space=vmem, size = 0x200, scoped, tag = 'scratch operand']
  #allocation8 [shape = 'f32[1,128]{1,0:T(1,128)}', space=vmem, size = 0x200, scoped, tag = 'scratch operand']
  #allocation9 [shape = 'f32[1,128]{1,0:T(1,128)}', space=vmem, size = 0x200, scoped, tag = 'scratch operand']
  %s0 = inlined_call_operand.hbm [shape: f32[64,256], index: 0, kind: input, shape index: {}]
  %s1 = inlined_call_operand.hbm [shape: f32[64,256], index: 1, kind: input, shape index: {}]
  %s2 = inlined_call_operand.hbm [shape: bf16[256,128], index: 2, kind: input, shape index: {}]
  %s3 = inlined_call_operand.hbm [shape: f32[1,128], index: 3, kind: input, shape index: {}]
  %s4 = inlined_call_operand.hbm [shape: bf16[128,128], index: 4, kind: input, shape index: {}]
  %s5 = inlined_call_operand.hbm [shape: f32[1,128], index: 5, kind: input, shape index: {}]
  %s6 = inlined_call_operand.hbm [shape: bf16[128,128], index: 6, kind: input, shape index: {}]
  %s7 = inlined_call_operand.hbm [shape: f32[1,128], index: 7, kind: input, shape index: {}]
  %s8 = inlined_call_operand.hbm [shape: bf16[128,256], index: 8, kind: input, shape index: {}]
  %s9 = inlined_call_operand.hbm [shape: f32[1,256], index: 9, kind: input, shape index: {}]
  %s10 = inlined_call_operand.hbm [shape: f32[64,128], index: 10, kind: output, shape index: {0}]
  %s11 = inlined_call_operand.hbm [shape: f32[1,1], index: 11, kind: output, shape index: {1}]
  %12 = xla_tuple %s10, %s11
  %s13 = sld [smem:[#allocation0]]
  $region149: #{tpu_custom_call.1} parent=0
    _
  %s15 = ssub.s32 1, %s13
  %s16 = scalar_select 0, %s15, %s13
  $region1: #{tpu_custom_call.1} parent=0
    #allocation10 [shape = 'u8[32768]{0}', space=vmem, size = 0x8000, scoped, tag = 'input window, operand 0']
    #allocation11 [shape = 's32[2]{0}', space=sflag, size = 0x8, scoped, tag = 'scoped memory for tpu_custom_call.1']
    #allocation12 [shape = 's32[2]{0}', space=sflag, size = 0x8, scoped, tag = 'scoped memory for tpu_custom_call.1']
    #allocation13 [shape = 'u8[32768]{0}', space=vmem, size = 0x8000, scoped, tag = 'input window, operand 1']
    #allocation14 [shape = 's32[2]{0}', space=sflag, size = 0x8, scoped, tag = 'scoped memory for tpu_custom_call.1']
    #allocation15 [shape = 'u8[65536]{0}', space=vmem, size = 0x10000, scoped, tag = 'input window, operand 2, single buffered']
    #allocation16 [shape = 'u8[512]{0}', space=vmem, size = 0x400, scoped, tag = 'input window, operand 3, single buffered']
    #allocation17 [shape = 's32[1]{0}', space=sflag, size = 0x4, scoped, tag = 'scoped memory for tpu_custom_call.1']
    #allocation18 [shape = 'u8[32768]{0}', space=vmem, size = 0x8000, scoped, tag = 'input window, operand 4, single buffered']
    #allocation19 [shape = 'u8[512]{0}', space=vmem, size = 0x400, scoped, tag = 'input window, operand 5, single buffered']
    #allocation20 [shape = 's32[1]{0}', space=sflag, size = 0x4, scoped, tag = 'scoped memory for tpu_custom_call.1']
    #allocation21 [shape = 'u8[32768]{0}', space=vmem, size = 0x8000, scoped, tag = 'input window, operand 6, single buffered']
    #allocation22 [shape = 'u8[512]{0}', space=vmem, size = 0x400, scoped, tag = 'input window, operand 7, single buffered']
    #allocation23 [shape = 's32[1]{0}', space=sflag, size = 0x4, scoped, tag = 'scoped memory for tpu_custom_call.1']
    #allocation24 [shape = 'u8[65536]{0}', space=vmem, size = 0x10000, scoped, tag = 'input window, operand 8, single buffered']
    #allocation25 [shape = 'u8[1024]{0}', space=vmem, size = 0x400, scoped, tag = 'input window, operand 9, single buffered']
    #allocation26 [shape = 's32[1]{0}', space=sflag, size = 0x4, scoped, tag = 'scoped memory for tpu_custom_call.1']
    #allocation27 [shape = 'u8[16384]{0}', space=vmem, size = 0x4000, scoped, tag = 'output window, operand 0']
    #allocation28 [shape = 'u8[512]{0}', space=vmem, size = 0x400, scoped, tag = 'output window, operand 1, single buffered']
    #allocation29 [shape = 's32[1]{0}', space=sflag, size = 0x4, scoped, tag = 'scoped memory for tpu_custom_call.1']
    %17 = vsyncpa [#allocation11], 0
    %s18 = scalar_lea.sflag [#allocation11], 1
    %19 = vsyncpa %s18, 0
    %20 = vsyncpa [#allocation14], 0
    %s21 = scalar_lea.sflag [#allocation14], 1
    %22 = vsyncpa %s21, 0
    %23 = vsyncpa [#allocation17], 0
    %24 = vsyncpa [#allocation20], 0
    %25 = vsyncpa [#allocation23], 0
    %26 = vsyncpa [#allocation26], 0
    %27 = vsyncpa [#allocation12], 0
    %s28 = scalar_lea.sflag [#allocation12], 1
    %29 = vsyncpa %s28, 0
    %30 = vsyncpa [#allocation29], 0
    loop: start=0, step=1, limit=18
    $region2: #{tpu_custom_call.1} parent=1 // loop_pre_header
      _
    $region3: #{tpu_custom_call.1} parent=1 // loop_header
      %s32 = sphi 0, %s36
      %p33 = scmp.ge.s32.totalorder %s32, 18
      %s39 = sphi 0, %s51
      %s40 = sphi 0, %s47
      %s41 = sphi 0, %s39
      %s42 = sphi 0, %s40
      %s43 = sphi 0, %s41
      %s44 = sphi 0, %s42
      %s54 = sphi 0, %s56
      %s57 = sphi 0, %s54
      %s58 = sphi 0, %s57
      %s74 = sphi 0, %s58
      %s80 = sphi 0, %s82
      %s83 = sphi 0, %s80
      %s84 = sphi 0, %s83
      %s100 = sphi 0, %s84
      %s104 = sphi 0, %s104
      %s106 = sphi 0, %s104
      %s107 = sphi 0, %s106
      %s121 = sphi 0, %s107
      %s125 = sphi 0, %s125
      %s127 = sphi 0, %s125
      %s128 = sphi 0, %s127
      %s142 = sphi 0, %s128
      %s146 = sphi 0, %s146
      %s148 = sphi 0, %s146
      %s149 = sphi 0, %s148
      %s163 = sphi 0, %s149
      %s167 = sphi 0, %s167
      %s169 = sphi 0, %s167
      %s170 = sphi 0, %s169
      %s184 = sphi 0, %s170
      %s188 = sphi 0, %s188
      %s190 = sphi 0, %s188
      %s191 = sphi 0, %s190
      %s205 = sphi 0, %s191
      %s209 = sphi 0, %s209
      %s211 = sphi 0, %s209
      %s212 = sphi 0, %s211
      %s226 = sphi 0, %s212
      %s230 = sphi 0, %s230
      %s232 = sphi 0, %s230
      %s233 = sphi 0, %s232
      %s247 = sphi 0, %s233
      %s251 = sphi 0, %s251
      %s253 = sphi 0, %s251
      %s254 = sphi 0, %s253
      %s268 = sphi 0, %s254
      %s274 = sphi 0, %s276
      %s277 = sphi 0, %s274
      %s278 = sphi 0, %s277
      %s294 = sphi 0, %s278
      %s298 = sphi 0, %s298
      %s300 = sphi 0, %s298
      %s301 = sphi 0, %s300
      %s315 = sphi 0, %s301
    $region4: #{tpu_custom_call.1} parent=1 // loop_header_branch
      %35 = sbr.rel (%p33) target = $region8
    $region5: #{tpu_custom_call.1} parent=1 // loop_body
      %s37 = ssub.s32 %s32, 1
      %s38 = ssub.s32 %s32, 2
      %s45 = sadd.s32 1, %s40
      %p46 = scmp.ge.s32.totalorder %s45, 4
      %s47 = scalar_select %p46, 0, %s45
      %s48 = sadd.s32 1, %s39
      %s49 = scalar_select %p46, %s48, %s39
      %p50 = scmp.ge.s32.totalorder %s49, 4
      %s51 = scalar_select %p50, 0, %s49
      %s52 = ssub.s32 %s40, %s47
      %p53 = scmp.eq.s32.totalorder %s52, 0
      %s55 = sadd.s32 %s54, 1
      %s56 = scalar_select %p53, %s54, %s55
      %p59 = pneg %p53
      %p60 = scmp.eq.s32.totalorder %s32, 15
      %p61 = por %p59, %p60
      %p62 = scmp.ne.s32.totalorder %s54, %s57
      %p63 = scmp.eq.s32.totalorder %s32, 0
      %p64 = por %p62, %p63
      %p65 = scmp.ne.s32.totalorder %s54, %s57
      %p66 = scmp.eq.s32.totalorder %s37, 15
      %p67 = por %p65, %p66
      %p68 = scmp.ne.s32.totalorder %s57, %s58
      %p69 = scmp.eq.s32.totalorder %s37, 0
      %p70 = por %p68, %p69
      %p71 = scmp.ne.s32.totalorder %s57, %s58
      %p72 = scmp.eq.s32.totalorder %s38, 15
      %p73 = por %p71, %p72
      %p75 = scmp.ne.s32.totalorder %s58, %s74
      %p76 = scmp.eq.s32.totalorder %s38, 0
      %p77 = por %p75, %p76
      %s78 = ssub.s32 %s40, %s47
      %p79 = scmp.eq.s32.totalorder %s78, 0
      %s81 = sadd.s32 %s80, 1
      %s82 = scalar_select %p79, %s80, %s81
      %p85 = pneg %p79
      %p86 = scmp.eq.s32.totalorder %s32, 15
      %p87 = por %p85, %p86
      %p88 = scmp.ne.s32.totalorder %s80, %s83
      %p89 = scmp.eq.s32.totalorder %s32, 0
      %p90 = por %p88, %p89
      %p91 = scmp.ne.s32.totalorder %s80, %s83
      %p92 = scmp.eq.s32.totalorder %s37, 15
      %p93 = por %p91, %p92
      %p94 = scmp.ne.s32.totalorder %s83, %s84
      %p95 = scmp.eq.s32.totalorder %s37, 0
      %p96 = por %p94, %p95
      %p97 = scmp.ne.s32.totalorder %s83, %s84
      %p98 = scmp.eq.s32.totalorder %s38, 15
      %p99 = por %p97, %p98
      %p101 = scmp.ne.s32.totalorder %s84, %s100
      %p102 = scmp.eq.s32.totalorder %s38, 0
      %p103 = por %p101, %p102
      %s105 = sadd.s32 %s104, 1
      %p108 = scmp.eq.s32.totalorder %s32, 15
      %p109 = scmp.ne.s32.totalorder %s104, %s106
      %p110 = scmp.eq.s32.totalorder %s32, 0
      %p111 = por %p109, %p110
      %p112 = scmp.ne.s32.totalorder %s104, %s106
      %p113 = scmp.eq.s32.totalorder %s37, 15
      %p114 = por %p112, %p113
      %p115 = scmp.ne.s32.totalorder %s106, %s107
      %p116 = scmp.eq.s32.totalorder %s37, 0
      %p117 = por %p115, %p116
      %p118 = scmp.ne.s32.totalorder %s106, %s107
      %p119 = scmp.eq.s32.totalorder %s38, 15
      %p120 = por %p118, %p119
      %p122 = scmp.ne.s32.totalorder %s107, %s121
      %p123 = scmp.eq.s32.totalorder %s38, 0
      %p124 = por %p122, %p123
      %s126 = sadd.s32 %s125, 1
      %p129 = scmp.eq.s32.totalorder %s32, 15
      %p130 = scmp.ne.s32.totalorder %s125, %s127
      %p131 = scmp.eq.s32.totalorder %s32, 0
      %p132 = por %p130, %p131
      %p133 = scmp.ne.s32.totalorder %s125, %s127
      %p134 = scmp.eq.s32.totalorder %s37, 15
      %p135 = por %p133, %p134
      %p136 = scmp.ne.s32.totalorder %s127, %s128
      %p137 = scmp.eq.s32.totalorder %s37, 0
      %p138 = por %p136, %p137
      %p139 = scmp.ne.s32.totalorder %s127, %s128
      %p140 = scmp.eq.s32.totalorder %s38, 15
      %p141 = por %p139, %p140
      %p143 = scmp.ne.s32.totalorder %s128, %s142
      %p144 = scmp.eq.s32.totalorder %s38, 0
      %p145 = por %p143, %p144
      %s147 = sadd.s32 %s146, 1
      %p150 = scmp.eq.s32.totalorder %s32, 15
      %p151 = scmp.ne.s32.totalorder %s146, %s148
      %p152 = scmp.eq.s32.totalorder %s32, 0
      %p153 = por %p151, %p152
      %p154 = scmp.ne.s32.totalorder %s146, %s148
      %p155 = scmp.eq.s32.totalorder %s37, 15
      %p156 = por %p154, %p155
      %p157 = scmp.ne.s32.totalorder %s148, %s149
      %p158 = scmp.eq.s32.totalorder %s37, 0
      %p159 = por %p157, %p158
      %p160 = scmp.ne.s32.totalorder %s148, %s149
      %p161 = scmp.eq.s32.totalorder %s38, 15
      %p162 = por %p160, %p161
      %p164 = scmp.ne.s32.totalorder %s149, %s163
      %p165 = scmp.eq.s32.totalorder %s38, 0
      %p166 = por %p164, %p165
      %s168 = sadd.s32 %s167, 1
      %p171 = scmp.eq.s32.totalorder %s32, 15
      %p172 = scmp.ne.s32.totalorder %s167, %s169
      %p173 = scmp.eq.s32.totalorder %s32, 0
      %p174 = por %p172, %p173
      %p175 = scmp.ne.s32.totalorder %s167, %s169
      %p176 = scmp.eq.s32.totalorder %s37, 15
      %p177 = por %p175, %p176
      %p178 = scmp.ne.s32.totalorder %s169, %s170
      %p179 = scmp.eq.s32.totalorder %s37, 0
      %p180 = por %p178, %p179
      %p181 = scmp.ne.s32.totalorder %s169, %s170
      %p182 = scmp.eq.s32.totalorder %s38, 15
      %p183 = por %p181, %p182
      %p185 = scmp.ne.s32.totalorder %s170, %s184
      %p186 = scmp.eq.s32.totalorder %s38, 0
      %p187 = por %p185, %p186
      %s189 = sadd.s32 %s188, 1
      %p192 = scmp.eq.s32.totalorder %s32, 15
      %p193 = scmp.ne.s32.totalorder %s188, %s190
      %p194 = scmp.eq.s32.totalorder %s32, 0
      %p195 = por %p193, %p194
      %p196 = scmp.ne.s32.totalorder %s188, %s190
      %p197 = scmp.eq.s32.totalorder %s37, 15
      %p198 = por %p196, %p197
      %p199 = scmp.ne.s32.totalorder %s190, %s191
      %p200 = scmp.eq.s32.totalorder %s37, 0
      %p201 = por %p199, %p200
      %p202 = scmp.ne.s32.totalorder %s190, %s191
      %p203 = scmp.eq.s32.totalorder %s38, 15
      %p204 = por %p202, %p203
      %p206 = scmp.ne.s32.totalorder %s191, %s205
      %p207 = scmp.eq.s32.totalorder %s38, 0
      %p208 = por %p206, %p207
      %s210 = sadd.s32 %s209, 1
      %p213 = scmp.eq.s32.totalorder %s32, 15
      %p214 = scmp.ne.s32.totalorder %s209, %s211
      %p215 = scmp.eq.s32.totalorder %s32, 0
      %p216 = por %p214, %p215
      %p217 = scmp.ne.s32.totalorder %s209, %s211
      %p218 = scmp.eq.s32.totalorder %s37, 15
      %p219 = por %p217, %p218
      %p220 = scmp.ne.s32.totalorder %s211, %s212
      %p221 = scmp.eq.s32.totalorder %s37, 0
      %p222 = por %p220, %p221
      %p223 = scmp.ne.s32.totalorder %s211, %s212
      %p224 = scmp.eq.s32.totalorder %s38, 15
      %p225 = por %p223, %p224
      %p227 = scmp.ne.s32.totalorder %s212, %s226
      %p228 = scmp.eq.s32.totalorder %s38, 0
      %p229 = por %p227, %p228
      %s231 = sadd.s32 %s230, 1
      %p234 = scmp.eq.s32.totalorder %s32, 15
      %p235 = scmp.ne.s32.totalorder %s230, %s232
      %p236 = scmp.eq.s32.totalorder %s32, 0
      %p237 = por %p235, %p236
      %p238 = scmp.ne.s32.totalorder %s230, %s232
      %p239 = scmp.eq.s32.totalorder %s37, 15
      %p240 = por %p238, %p239
      %p241 = scmp.ne.s32.totalorder %s232, %s233
      %p242 = scmp.eq.s32.totalorder %s37, 0
      %p243 = por %p241, %p242
      %p244 = scmp.ne.s32.totalorder %s232, %s233
      %p245 = scmp.eq.s32.totalorder %s38, 15
      %p246 = por %p244, %p245
      %p248 = scmp.ne.s32.totalorder %s233, %s247
      %p249 = scmp.eq.s32.totalorder %s38, 0
      %p250 = por %p248, %p249
      %s252 = sadd.s32 %s251, 1
      %p255 = scmp.eq.s32.totalorder %s32, 15
      %p256 = scmp.ne.s32.totalorder %s251, %s253
      %p257 = scmp.eq.s32.totalorder %s32, 0
      %p258 = por %p256, %p257
      %p259 = scmp.ne.s32.totalorder %s251, %s253
      %p260 = scmp.eq.s32.totalorder %s37, 15
      %p261 = por %p259, %p260
      %p262 = scmp.ne.s32.totalorder %s253, %s254
      %p263 = scmp.eq.s32.totalorder %s37, 0
      %p264 = por %p262, %p263
      %p265 = scmp.ne.s32.totalorder %s253, %s254
      %p266 = scmp.eq.s32.totalorder %s38, 15
      %p267 = por %p265, %p266
      %p269 = scmp.ne.s32.totalorder %s254, %s268
      %p270 = scmp.eq.s32.totalorder %s38, 0
      %p271 = por %p269, %p270
      %s272 = ssub.s32 %s40, %s47
      %p273 = scmp.eq.s32.totalorder %s272, 0
      %s275 = sadd.s32 %s274, 1
      %s276 = scalar_select %p273, %s274, %s275
      %p279 = pneg %p273
      %p280 = scmp.eq.s32.totalorder %s32, 15
      %p281 = por %p279, %p280
      %p282 = scmp.ne.s32.totalorder %s274, %s277
      %p283 = scmp.eq.s32.totalorder %s32, 0
      %p284 = por %p282, %p283
      %p285 = scmp.ne.s32.totalorder %s274, %s277
      %p286 = scmp.eq.s32.totalorder %s37, 15
      %p287 = por %p285, %p286
      %p288 = scmp.ne.s32.totalorder %s277, %s278
      %p289 = scmp.eq.s32.totalorder %s37, 0
      %p290 = por %p288, %p289
      %p291 = scmp.ne.s32.totalorder %s277, %s278
      %p292 = scmp.eq.s32.totalorder %s38, 15
      %p293 = por %p291, %p292
      %p295 = scmp.ne.s32.totalorder %s278, %s294
      %p296 = scmp.eq.s32.totalorder %s38, 0
      %p297 = por %p295, %p296
      %s299 = sadd.s32 %s298, 1
      %p302 = scmp.eq.s32.totalorder %s32, 15
      %p303 = scmp.ne.s32.totalorder %s298, %s300
      %p304 = scmp.eq.s32.totalorder %s32, 0
      %p305 = por %p303, %p304
      %p306 = scmp.ne.s32.totalorder %s298, %s300
      %p307 = scmp.eq.s32.totalorder %s37, 15
      %p308 = por %p306, %p307
      %p309 = scmp.ne.s32.totalorder %s300, %s301
      %p310 = scmp.eq.s32.totalorder %s37, 0
      %p311 = por %p309, %p310
      %p312 = scmp.ne.s32.totalorder %s300, %s301
      %p313 = scmp.eq.s32.totalorder %s38, 15
      %p314 = por %p312, %p313
      %p316 = scmp.ne.s32.totalorder %s301, %s315
      %p317 = scmp.eq.s32.totalorder %s38, 0
      %p318 = por %p316, %p317
      %p319 = scmp.le.s32.totalorder 1, %s32
      %p320 = scmp.lt.s32.totalorder %s32, 17
      %p321 = pnand %p319, %p320
      %p322 = pneg %p321
      // Predicated region
      $region9: #{tpu_custom_call.1} parent=5 // pred_check
        _
      $region10: #{tpu_custom_call.1} parent=5 // pred_check_branch
        %324 = sbr.rel (%p321) target = $region12
      $region11: #{tpu_custom_call.1} parent=5 // pred_region
        %s325 = ssub.s32 %s32, 1
        // Predicated region
        $region13: #{tpu_custom_call.1} parent=11 // pred_check
          %p326 = pneg %p117
        $region14: #{tpu_custom_call.1} parent=11 // pred_check_branch
          %328 = sbr.rel (%p326) target = $region16
        $region15: #{tpu_custom_call.1} parent=11 // pred_region
          %s330 = ssub.s32 2048, 2048
          %331 = vsyncadd [#allocation14], %s330
          %s332 = sshll.u32 [#allocation15], 4
          %s333 = int_to_ptr.vmem [resolvable:$true] %s332
          %338 = dma.hbm_to_vmem [thread:$0]  %s2, 2048, %s333, [#allocation14], 64, 64, 4
        $region16: #{tpu_custom_call.1} parent=11 // pred_fallthru
          _
        // Predicated region
        $region17: #{tpu_custom_call.1} parent=11 // pred_check
          %p339 = pneg %p138
        $region18: #{tpu_custom_call.1} parent=11 // pred_check_branch
          %341 = sbr.rel (%p339) target = $region20
        $region19: #{tpu_custom_call.1} parent=11 // pred_region
          %s343 = ssub.s32 16, 16
          %344 = vsyncadd [#allocation17], %s343
          %s346 = sshll.u32 [#allocation16], 4
          %s347 = int_to_ptr.vmem [resolvable:$true] %s346
          %349 = dma.hbm_to_vmem [thread:$0]  %s3, 16, %s347, [#allocation17]
        $region20: #{tpu_custom_call.1} parent=11 // pred_fallthru
          _
        // Predicated region
        $region21: #{tpu_custom_call.1} parent=11 // pred_check
          %p350 = pneg %p159
        $region22: #{tpu_custom_call.1} parent=11 // pred_check_branch
          %352 = sbr.rel (%p350) target = $region24
        $region23: #{tpu_custom_call.1} parent=11 // pred_region
          %s354 = ssub.s32 1024, 1024
          %355 = vsyncadd [#allocation17], %s354
          %s356 = sshll.u32 [#allocation18], 4
          %s357 = int_to_ptr.vmem [resolvable:$true] %s356
          %362 = dma.hbm_to_vmem [thread:$0]  %s4, 1024, %s357, [#allocation17], 64, 64, 4
        $region24: #{tpu_custom_call.1} parent=11 // pred_fallthru
          _
        // Predicated region
        $region25: #{tpu_custom_call.1} parent=11 // pred_check
          %p363 = pneg %p180
        $region26: #{tpu_custom_call.1} parent=11 // pred_check_branch
          %365 = sbr.rel (%p363) target = $region28
        $region27: #{tpu_custom_call.1} parent=11 // pred_region
          %s367 = ssub.s32 16, 16
          %368 = vsyncadd [#allocation20], %s367
          %s370 = sshll.u32 [#allocation19], 4
          %s371 = int_to_ptr.vmem [resolvable:$true] %s370
          %373 = dma.hbm_to_vmem [thread:$0]  %s5, 16, %s371, [#allocation20]
        $region28: #{tpu_custom_call.1} parent=11 // pred_fallthru
          _
        // Predicated region
        $region29: #{tpu_custom_call.1} parent=11 // pred_check
          %p374 = pneg %p201
        $region30: #{tpu_custom_call.1} parent=11 // pred_check_branch
          %376 = sbr.rel (%p374) target = $region32
        $region31: #{tpu_custom_call.1} parent=11 // pred_region
          %s378 = ssub.s32 1024, 1024
          %379 = vsyncadd [#allocation20], %s378
          %s380 = sshll.u32 [#allocation21], 4
          %s381 = int_to_ptr.vmem [resolvable:$true] %s380
          %386 = dma.hbm_to_vmem [thread:$0]  %s6, 1024, %s381, [#allocation20], 64, 64, 4
        $region32: #{tpu_custom_call.1} parent=11 // pred_fallthru
          _
        // Predicated region
        $region33: #{tpu_custom_call.1} parent=11 // pred_check
          %p387 = pneg %p222
        $region34: #{tpu_custom_call.1} parent=11 // pred_check_branch
          %389 = sbr.rel (%p387) target = $region36
        $region35: #{tpu_custom_call.1} parent=11 // pred_region
          %s391 = ssub.s32 16, 16
          %392 = vsyncadd [#allocation23], %s391
          %s394 = sshll.u32 [#allocation22], 4
          %s395 = int_to_ptr.vmem [resolvable:$true] %s394
          %397 = dma.hbm_to_vmem [thread:$0]  %s7, 16, %s395, [#allocation23]
        $region36: #{tpu_custom_call.1} parent=11 // pred_fallthru
          _
        // Predicated region
        $region37: #{tpu_custom_call.1} parent=11 // pred_check
          %p398 = pneg %p243
        $region38: #{tpu_custom_call.1} parent=11 // pred_check_branch
          %400 = sbr.rel (%p398) target = $region40
        $region39: #{tpu_custom_call.1} parent=11 // pred_region
          %s402 = ssub.s32 2048, 2048
          %403 = vsyncadd [#allocation23], %s402
          %s404 = sshll.u32 [#allocation24], 4
          %s405 = int_to_ptr.vmem [resolvable:$true] %s404
          %410 = dma.hbm_to_vmem [thread:$0]  %s8, 2048, %s405, [#allocation23], 128, 128, 8
        $region40: #{tpu_custom_call.1} parent=11 // pred_fallthru
          _
        // Predicated region
        $region41: #{tpu_custom_call.1} parent=11 // pred_check
          %p411 = pneg %p264
        $region42: #{tpu_custom_call.1} parent=11 // pred_check_branch
          %413 = sbr.rel (%p411) target = $region44
        $region43: #{tpu_custom_call.1} parent=11 // pred_region
          %s415 = ssub.s32 32, 32
          %416 = vsyncadd [#allocation26], %s415
          %s418 = sshll.u32 [#allocation25], 4
          %s419 = int_to_ptr.vmem [resolvable:$true] %s418
          %421 = dma.hbm_to_vmem [thread:$0]  %s9, 32, %s419, [#allocation26]
        $region44: #{tpu_custom_call.1} parent=11 // pred_fallthru
          _
      $region12: #{tpu_custom_call.1} parent=5 // pred_fallthru
        _
      %p422 = scmp.lt.s32.totalorder %s32, 16
      // Predicated region
      $region45: #{tpu_custom_call.1} parent=5 // pred_check
        %p423 = pneg %p422
      $region46: #{tpu_custom_call.1} parent=5 // pred_check_branch
        %425 = sbr.rel (%p423) target = $region48
      $region47: #{tpu_custom_call.1} parent=5 // pred_region
        // Predicated region
        $region49: #{tpu_custom_call.1} parent=47 // pred_check
          %p426 = pneg %p64
        $region50: #{tpu_custom_call.1} parent=47 // pred_check_branch
          %428 = sbr.rel (%p426) target = $region52
        $region51: #{tpu_custom_call.1} parent=47 // pred_region
          %s429 = sand.u32 %s54, 1
          %s430 = scalar_lea.sflag [#allocation11], %s429
          %s431 = sand.u32 %s54, 1
          %s432 = smul.addr %s431, 32
          %s433 = scalar_lea.vmem [#allocation10], %s432
          %s434 = smul.u32 2, %s40
          %s436 = ssub.s32 512, 512
          %437 = vsyncadd %s430, %s436
          %s438 = smul.addr %s434, 2
          %s439 = smul.addr %s438, 128
          %s440 = scalar_lea.hbm %s0, %s439
          %s441 = sshll.u32 %s433, 4
          %s442 = int_to_ptr.vmem [resolvable:$true] %s441
          %447 = dma.hbm_to_vmem [thread:$0]  %s440, 512, %s442, %s430, 256, 256, 16
        $region52: #{tpu_custom_call.1} parent=47 // pred_fallthru
          _
        // Predicated region
        $region53: #{tpu_custom_call.1} parent=47 // pred_check
          %p448 = pneg %p90
        $region54: #{tpu_custom_call.1} parent=47 // pred_check_branch
          %450 = sbr.rel (%p448) target = $region56
        $region55: #{tpu_custom_call.1} parent=47 // pred_region
          %s451 = sand.u32 %s32, 1
          %s452 = scalar_lea.sflag [#allocation14], %s451
          %s453 = sand.u32 %s80, 1
          %s454 = smul.addr %s453, 32
          %s455 = scalar_lea.vmem [#allocation13], %s454
          %s456 = smul.u32 2, %s40
          %s458 = ssub.s32 512, 512
          %459 = vsyncadd %s452, %s458
          %s460 = smul.addr %s456, 2
          %s461 = smul.addr %s460, 128
          %s462 = scalar_lea.hbm %s1, %s461
          %s463 = sshll.u32 %s455, 4
          %s464 = int_to_ptr.vmem [resolvable:$true] %s463
          %469 = dma.hbm_to_vmem [thread:$0]  %s462, 512, %s464, %s452, 256, 256, 16
        $region56: #{tpu_custom_call.1} parent=47 // pred_fallthru
          _
      $region48: #{tpu_custom_call.1} parent=5 // pred_fallthru
        _
      %p470 = scmp.le.s32.totalorder 1, %s32
      %p471 = scmp.lt.s32.totalorder %s32, 17
      %p472 = pnand %p470, %p471
      %p473 = pneg %p472
      // Predicated region
      $region57: #{tpu_custom_call.1} parent=5 // pred_check
        _
      $region58: #{tpu_custom_call.1} parent=5 // pred_check_branch
        %475 = sbr.rel (%p472) target = $region60
      $region59: #{tpu_custom_call.1} parent=5 // pred_region
        %s476 = ssub.s32 %s32, 1
        %s477 = sand.u32 %s57, 1
        %s478 = scalar_lea.sflag [#allocation11], %s477
        %s479 = sand.u32 %s57, 1
        %s480 = smul.addr %s479, 32
        %s481 = scalar_lea.vmem [#allocation10], %s480
        // Predicated region
        $region61: #{tpu_custom_call.1} parent=59 // pred_check
          %p482 = pneg %p70
        $region62: #{tpu_custom_call.1} parent=59 // pred_check_branch
          %484 = sbr.rel (%p482) target = $region64
        $region63: #{tpu_custom_call.1} parent=59 // pred_region
          %485 = dma.done %s478, 512
        $region64: #{tpu_custom_call.1} parent=59 // pred_fallthru
          _
        %s486 = sand.u32 %s37, 1
        %s487 = scalar_lea.sflag [#allocation14], %s486
        %s488 = sand.u32 %s83, 1
        %s489 = smul.addr %s488, 32
        %s490 = scalar_lea.vmem [#allocation13], %s489
        // Predicated region
        $region65: #{tpu_custom_call.1} parent=59 // pred_check
          %p491 = pneg %p96
        $region66: #{tpu_custom_call.1} parent=59 // pred_check_branch
          %493 = sbr.rel (%p491) target = $region68
        $region67: #{tpu_custom_call.1} parent=59 // pred_region
          %494 = dma.done %s487, 512
        $region68: #{tpu_custom_call.1} parent=59 // pred_fallthru
          _
        // Predicated region
        $region69: #{tpu_custom_call.1} parent=59 // pred_check
          %p495 = pneg %p117
        $region70: #{tpu_custom_call.1} parent=59 // pred_check_branch
          %497 = sbr.rel (%p495) target = $region72
        $region71: #{tpu_custom_call.1} parent=59 // pred_region
          %498 = dma.done [#allocation14], 2048
        $region72: #{tpu_custom_call.1} parent=59 // pred_fallthru
          _
        // Predicated region
        $region73: #{tpu_custom_call.1} parent=59 // pred_check
          %p499 = pneg %p138
        $region74: #{tpu_custom_call.1} parent=59 // pred_check_branch
          %501 = sbr.rel (%p499) target = $region76
        $region75: #{tpu_custom_call.1} parent=59 // pred_region
          %502 = dma.done [#allocation17], 16
        $region76: #{tpu_custom_call.1} parent=59 // pred_fallthru
          _
        // Predicated region
        $region77: #{tpu_custom_call.1} parent=59 // pred_check
          %p503 = pneg %p159
        $region78: #{tpu_custom_call.1} parent=59 // pred_check_branch
          %505 = sbr.rel (%p503) target = $region80
        $region79: #{tpu_custom_call.1} parent=59 // pred_region
          %506 = dma.done [#allocation17], 1024
        $region80: #{tpu_custom_call.1} parent=59 // pred_fallthru
          _
        // Predicated region
        $region81: #{tpu_custom_call.1} parent=59 // pred_check
          %p507 = pneg %p180
        $region82: #{tpu_custom_call.1} parent=59 // pred_check_branch
          %509 = sbr.rel (%p507) target = $region84
        $region83: #{tpu_custom_call.1} parent=59 // pred_region
          %510 = dma.done [#allocation20], 16
        $region84: #{tpu_custom_call.1} parent=59 // pred_fallthru
          _
        // Predicated region
        $region85: #{tpu_custom_call.1} parent=59 // pred_check
          %p511 = pneg %p201
        $region86: #{tpu_custom_call.1} parent=59 // pred_check_branch
          %513 = sbr.rel (%p511) target = $region88
        $region87: #{tpu_custom_call.1} parent=59 // pred_region
          %514 = dma.done [#allocation20], 1024
        $region88: #{tpu_custom_call.1} parent=59 // pred_fallthru
          _
        // Predicated region
        $region89: #{tpu_custom_call.1} parent=59 // pred_check
          %p515 = pneg %p222
        $region90: #{tpu_custom_call.1} parent=59 // pred_check_branch
          %517 = sbr.rel (%p515) target = $region92
        $region91: #{tpu_custom_call.1} parent=59 // pred_region
          %518 = dma.done [#allocation23], 16
        $region92: #{tpu_custom_call.1} parent=59 // pred_fallthru
          _
        // Predicated region
        $region93: #{tpu_custom_call.1} parent=59 // pred_check
          %p519 = pneg %p243
        $region94: #{tpu_custom_call.1} parent=59 // pred_check_branch
          %521 = sbr.rel (%p519) target = $region96
        $region95: #{tpu_custom_call.1} parent=59 // pred_region
          %522 = dma.done [#allocation23], 2048
        $region96: #{tpu_custom_call.1} parent=59 // pred_fallthru
          _
        // Predicated region
        $region97: #{tpu_custom_call.1} parent=59 // pred_check
          %p523 = pneg %p264
        $region98: #{tpu_custom_call.1} parent=59 // pred_check_branch
          %525 = sbr.rel (%p523) target = $region100
        $region99: #{tpu_custom_call.1} parent=59 // pred_region
          %526 = dma.done [#allocation26], 32
        $region100: #{tpu_custom_call.1} parent=59 // pred_fallthru
          _
        %s527 = sand.u32 %s57, 1
        %s528 = scalar_lea.sflag [#allocation11], %s527
        %s529 = sand.u32 %s57, 1
        %s530 = smul.addr %s529, 32
        %s531 = scalar_lea.vmem [#allocation10], %s530
        %p532 = pneg %p70
        %p533 = pneg %p67
        %s534 = sand.u32 %s37, 1
        %s535 = scalar_lea.sflag [#allocation14], %s534
        %s536 = sand.u32 %s83, 1
        %s537 = smul.addr %s536, 32
        %s538 = scalar_lea.vmem [#allocation13], %s537
        %p539 = pneg %p96
        %p540 = pneg %p93
        %p541 = pneg %p117
        %p542 = pneg %p114
        %p543 = pneg %p138
        %p544 = pneg %p135
        %p545 = pneg %p159
        %p546 = pneg %p156
        %p547 = pneg %p180
        %p548 = pneg %p177
        %p549 = pneg %p201
        %p550 = pneg %p198
        %p551 = pneg %p222
        %p552 = pneg %p219
        %p553 = pneg %p243
        %p554 = pneg %p240
        %p555 = pneg %p264
        %p556 = pneg %p261
        %p557 = pneg %p290
        %p558 = pneg %p287
        %s559 = sand.u32 %s277, 1
        %s560 = scalar_lea.sflag [#allocation12], %s559
        %s561 = sand.u32 %s277, 1
        %s562 = smul.addr %s561, 16
        %s563 = scalar_lea.vmem [#allocation27], %s562
        %p564 = pneg %p311
        %p565 = pneg %p308
        %s566 = smul.u32 2, %s42
        %s567 = smul.u32 2, %s42
        %s568 = smul.u32 2, %s42
        %p570 = scmp.eq.s32.totalorder %s42, 3
        %p571 = scmp.eq.s32.totalorder %s42, 0
        %p572 = scmp.eq.s32.totalorder %s41, 0
        // Predicated region
        $region101: #{tpu_custom_call.1} parent=59 // pred_check
          %p573 = pneg %p572
        $region102: #{tpu_custom_call.1} parent=59 // pred_check_branch
          %575 = sbr.rel (%p573) target = $region104
        $region103: #{tpu_custom_call.1} parent=59 // pred_region
          %v576 = vld [vmem:[%s481] sm:$0xff]
          %v577 = vld [vmem:[%s481 + $0x8] sm:$0xff]
          %v578 = vld [vmem:[%s481 + $0x10] sm:$0xff]
          %v579 = vld [vmem:[%s481 + $0x18] sm:$0xff]
          %v580 = vld [vmem:[%s490] sm:$0xff]
          %v581 = vld [vmem:[%s490 + $0x8] sm:$0xff]
          %v582 = vld [vmem:[%s490 + $0x10] sm:$0xff]
          %v583 = vld [vmem:[%s490 + $0x18] sm:$0xff]
          %v584 = vmul.f32 %v576, %v580
          %v585 = vmul.f32 %v577, %v581
          %v586 = vmul.f32 %v578, %v582
          %v587 = vmul.f32 %v579, %v583
          %v588 = vadd.f32 %v584, %v586
          %v589 = vrot.slane %v588, 4
          %v590 = vadd.f32 %v588, %v589
          %v591 = vrot.slane %v590, 2
          %v592 = vadd.f32 %v590, %v591
          %v593 = vrot.slane %v592, 1
          %v594 = vadd.f32 %v592, %v593
          %v595 = vadd.f32 %v585, %v587
          %v596 = vrot.slane %v595, 4
          %v597 = vadd.f32 %v595, %v596
          %v598 = vrot.slane %v597, 2
          %v599 = vadd.f32 %v597, %v598
          %v600 = vrot.slane %v599, 1
          %v601 = vadd.f32 %v599, %v600
          %v602 = vrcp.pop 16.0
          %v603 = vmul.f32 %v594, %v602
          %v604 = vmul.f32 %v601, %v602
          %v605 = vsub.f32 %v584, %v603
          %v606 = vsub.f32 %v585, %v604
          %v607 = vsub.f32 %v586, %v603
          %v608 = vsub.f32 %v587, %v604
          %v609 = vmul.f32 %v605, %v605
          %v610 = vmul.f32 %v606, %v606
          %v611 = vmul.f32 %v607, %v607
          %v612 = vmul.f32 %v608, %v608
          %v613 = vadd.f32 %v609, %v611
          %v614 = vrot.slane %v613, 4
          %v615 = vadd.f32 %v613, %v614
          %v616 = vrot.slane %v615, 2
          %v617 = vadd.f32 %v615, %v616
          %v618 = vrot.slane %v617, 1
          %v619 = vadd.f32 %v617, %v618
          %v620 = vadd.f32 %v610, %v612
          %v621 = vrot.slane %v620, 4
          %v622 = vadd.f32 %v620, %v621
          %v623 = vrot.slane %v622, 2
          %v624 = vadd.f32 %v622, %v623
          %v625 = vrot.slane %v624, 1
          %v626 = vadd.f32 %v624, %v625
          %v627 = vld [vmem:[#allocation2] sm:$0x3]
          %s628 = scalar_select %p571, 1, 0
          %v629 = vstv %s628
          %vm630 = vcmp.eq.s32.totalorder %v629, 1
          %v631 = vsel %vm630, 0.0, %v627
          %v632 = vld [vmem:[#allocation3] sm:$0x3]
          %v633 = vsel %vm630, 0.0, %v632
          %s634 = smul.u32 %s42, 16
          %s635 = scvt.s32.f32 %s634
          %s636 = sadd.f32 %s635, 16.0
          %v638 = vlaneseq
          %v639 = vshrl.u32 %v638, 7
          %v640 = vsub.s32 0, %v639
          %v641 = vrot.slane %v631, %v640
          %v642 = vlaneseq
          %v643 = vshrl.u32 %v642, 7
          %v644 = vsub.s32 1, %v643
          %v645 = vrot.slane %v631, %v644
          %v648 = vsub.f32 %v603, %v641
          %v649 = vsub.f32 %v604, %v645
          %v650 = vstv %s636
          %v651 = vrcp.pop %v650
          %s652 = vtos %v651
          %s653 = smul.f32 16.0, %s652
          %v654 = vstv %s653
          %v655 = vmul.f32 %v648, %v654
          %v656 = vmul.f32 %v649, %v654
          %v659 = vcombine.low %v655, %v656
          %v661 = vunpack.c.l.s4 1966171168
          %v662 = vunpack.c.0.s8 %v661
          %v663 = vlaneseq
          %v664 = vshrl.u32 %v663, 7
          %v665 = vsub.s32 %v662, %v664
          %v666 = vrot.slane %v659, %v665
          %v668 = vunpack.c.l.s4 1966171168
          %v669 = vunpack.c.0.s8 %v668
          %v670 = vlaneseq
          %v671 = vshrl.u32 %v670, 7
          %v672 = vsub.s32 %v669, %v671
          %v673 = vrot.slane %v666, %v672
          %v675 = vadd.f32 %v631, %v673
          %v676 = vlaneseq
          %vm677 = vcmp.ge.s32.totalorder %v676, 0
          %vm678 = vcmp.lt.s32.totalorder %v676, 256
          %vm679 = vmand %vm677, %vm678
          %680 = vst.msk [vmem:[#allocation2] sm:$0x3] %vm679, %v675
          %v683 = vcombine.low %v619, %v626
          %v685 = vunpack.c.l.s4 1966171168
          %v686 = vunpack.c.0.s8 %v685
          %v687 = vlaneseq
          %v688 = vshrl.u32 %v687, 7
          %v689 = vsub.s32 %v686, %v688
          %v690 = vrot.slane %v683, %v689
          %v692 = vunpack.c.l.s4 1966171168
          %v693 = vunpack.c.0.s8 %v692
          %v694 = vlaneseq
          %v695 = vshrl.u32 %v694, 7
          %v696 = vsub.s32 %v693, %v695
          %v697 = vrot.slane %v690, %v696
          %v699 = vadd.f32 %v633, %v697
          %v700 = vmul.f32 %v648, %v648
          %v701 = vmul.f32 %v649, %v649
          %s702 = smul.f32 %s635, 16.0
          %v703 = vstv %s636
          %v704 = vrcp.pop %v703
          %s705 = vtos %v704
          %s706 = smul.f32 %s702, %s705
          %v707 = vstv %s706
          %v708 = vmul.f32 %v700, %v707
          %v709 = vmul.f32 %v701, %v707
          %v712 = vcombine.low %v708, %v709
          %v714 = vunpack.c.l.s4 1966171168
          %v715 = vunpack.c.0.s8 %v714
          %v716 = vlaneseq
          %v717 = vshrl.u32 %v716, 7
          %v718 = vsub.s32 %v715, %v717
          %v719 = vrot.slane %v712, %v718
          %v721 = vunpack.c.l.s4 1966171168
          %v722 = vunpack.c.0.s8 %v721
          %v723 = vlaneseq
          %v724 = vshrl.u32 %v723, 7
          %v725 = vsub.s32 %v722, %v724
          %v726 = vrot.slane %v719, %v725
          %v728 = vadd.f32 %v699, %v726
          %729 = vst.msk [vmem:[#allocation3] sm:$0x3] %vm679, %v728
        $region104: #{tpu_custom_call.1} parent=59 // pred_fallthru
          _
        %p730 = pnand %p572, %p570
        %p731 = pneg %p730
        // Predicated region
        $region105: #{tpu_custom_call.1} parent=59 // pred_check
          _
        $region106: #{tpu_custom_call.1} parent=59 // pred_check_branch
          %733 = sbr.rel (%p730) target = $region108
        $region107: #{tpu_custom_call.1} parent=59 // pred_region
          %v734 = vld [vmem:[#allocation3] sm:$0x3]
          %v735 = vmul.f32 %v734, 0.015625
          %v736 = vadd.f32 %v735, 1e-05
          %v737 = vrsqrt.pop %v736
          %v738 = vlaneseq
          %vm739 = vcmp.ge.s32.totalorder %v738, 0
          %vm740 = vcmp.lt.s32.totalorder %v738, 256
          %vm741 = vmand %vm739, %vm740
          %742 = vst.msk [vmem:[#allocation3] sm:$0x3] %vm741, %v737
        $region108: #{tpu_custom_call.1} parent=59 // pred_fallthru
          _
        %p743 = scmp.eq.s32.totalorder %s41, 1
        // Predicated region
        $region109: #{tpu_custom_call.1} parent=59 // pred_check
          %p744 = pneg %p743
        $region110: #{tpu_custom_call.1} parent=59 // pred_check_branch
          %746 = sbr.rel (%p744) target = $region112
        $region111: #{tpu_custom_call.1} parent=59 // pred_region
          %v747 = vld [vmem:[%s481] sm:$0xff]
          %v748 = vld [vmem:[%s481 + $0x8] sm:$0xff]
          %v749 = vld [vmem:[%s481 + $0x10] sm:$0xff]
          %v750 = vld [vmem:[%s481 + $0x18] sm:$0xff]
          %v751 = vld [vmem:[%s490] sm:$0xff]
          %v752 = vld [vmem:[%s490 + $0x8] sm:$0xff]
          %v753 = vld [vmem:[%s490 + $0x10] sm:$0xff]
          %v754 = vld [vmem:[%s490 + $0x18] sm:$0xff]
          %v755 = vmul.f32 %v747, %v751
          %v756 = vmul.f32 %v748, %v752
          %v757 = vmul.f32 %v749, %v753
          %v758 = vmul.f32 %v750, %v754
          %v759 = vld [vmem:[#allocation2] sm:$0x3]
          %v761 = vlaneseq
          %v762 = vshrl.u32 %v761, 7
          %v763 = vsub.s32 0, %v762
          %v764 = vrot.slane %v759, %v763
          %v765 = vlaneseq
          %v766 = vshrl.u32 %v765, 7
          %v767 = vsub.s32 1, %v766
          %v768 = vrot.slane %v759, %v767
          %v771 = vsub.f32 %v755, %v764
          %v772 = vsub.f32 %v756, %v768
          %v773 = vsub.f32 %v757, %v764
          %v774 = vsub.f32 %v758, %v768
          %v775 = vld [vmem:[#allocation3] sm:$0x3]
          %v777 = vlaneseq
          %v778 = vshrl.u32 %v777, 7
          %v779 = vsub.s32 0, %v778
          %v780 = vrot.slane %v775, %v779
          %v781 = vlaneseq
          %v782 = vshrl.u32 %v781, 7
          %v783 = vsub.s32 1, %v782
          %v784 = vrot.slane %v775, %v783
          %v787 = vmul.f32 %v771, %v780
          %v788 = vmul.f32 %v772, %v784
          %v789 = vmul.f32 %v773, %v780
          %v790 = vmul.f32 %v774, %v784
          %v791 = vld [vmem:[#allocation15] sm:$0xf]
          %v792 = vld [vmem:[#allocation15 + $0x4] sm:$0xf]
          %v793 = vld [vmem:[#allocation15 + $0x8] sm:$0xf]
          %v794 = vld [vmem:[#allocation15 + $0xc] sm:$0xf]
          %v795 = vld [vmem:[#allocation15 + $0x10] sm:$0xf]
          %v796 = vld [vmem:[#allocation15 + $0x14] sm:$0xf]
          %v797 = vld [vmem:[#allocation15 + $0x18] sm:$0xf]
          %v798 = vld [vmem:[#allocation15 + $0x1c] sm:$0xf]
          %v799 = vld [vmem:[#allocation15 + $0x20] sm:$0xf]
          %v800 = vld [vmem:[#allocation15 + $0x24] sm:$0xf]
          %v801 = vld [vmem:[#allocation15 + $0x28] sm:$0xf]
          %v802 = vld [vmem:[#allocation15 + $0x2c] sm:$0xf]
          %v803 = vld [vmem:[#allocation15 + $0x30] sm:$0xf]
          %v804 = vld [vmem:[#allocation15 + $0x34] sm:$0xf]
          %v805 = vld [vmem:[#allocation15 + $0x38] sm:$0xf]
          %v806 = vld [vmem:[#allocation15 + $0x3c] sm:$0xf]
          %v807 = vld [vmem:[#allocation15 + $0x40] sm:$0xf]
          %v808 = vld [vmem:[#allocation15 + $0x44] sm:$0xf]
          %v809 = vld [vmem:[#allocation15 + $0x48] sm:$0xf]
          %v810 = vld [vmem:[#allocation15 + $0x4c] sm:$0xf]
          %v811 = vld [vmem:[#allocation15 + $0x50] sm:$0xf]
          %v812 = vld [vmem:[#allocation15 + $0x54] sm:$0xf]
          %v813 = vld [vmem:[#allocation15 + $0x58] sm:$0xf]
          %v814 = vld [vmem:[#allocation15 + $0x5c] sm:$0xf]
          %v815 = vld [vmem:[#allocation15 + $0x60] sm:$0xf]
          %v816 = vld [vmem:[#allocation15 + $0x64] sm:$0xf]
          %v817 = vld [vmem:[#allocation15 + $0x68] sm:$0xf]
          %v818 = vld [vmem:[#allocation15 + $0x6c] sm:$0xf]
          %v819 = vld [vmem:[#allocation15 + $0x70] sm:$0xf]
          %v820 = vld [vmem:[#allocation15 + $0x74] sm:$0xf]
          %v821 = vld [vmem:[#allocation15 + $0x78] sm:$0xf]
          %v822 = vld [vmem:[#allocation15 + $0x7c] sm:$0xf]
          %v823 = vpack.c.bf16 %v789, %v787
          %v824 = vpack.c.bf16 %v790, %v788
          %v825 = vld [vmem:[#allocation16] sm:$0x1]
          %v827 = vlaneseq
          %v828 = vshrl.u32 %v827, 7
          %v829 = vsub.s32 0, %v828
          %v830 = vrot.slane %v825, %v829
          %v864 = vunpack.c.l.b16 %v791
          %v865 = vunpack.c.l.b16 %v792
          %v866 = vunpack.c.l.b16 %v793
          %v867 = vunpack.c.l.b16 %v794
          %v868 = vunpack.c.l.b16 %v795
          %v869 = vunpack.c.l.b16 %v796
          %v870 = vunpack.c.l.b16 %v797
          %v871 = vunpack.c.l.b16 %v798
          %v872 = vunpack.c.l.b16 %v799
          %v873 = vunpack.c.l.b16 %v800
          %v874 = vunpack.c.l.b16 %v801
          %v875 = vunpack.c.l.b16 %v802
          %v876 = vunpack.c.l.b16 %v803
          %v877 = vunpack.c.l.b16 %v804
          %v878 = vunpack.c.l.b16 %v805
          %v879 = vunpack.c.l.b16 %v806
          %v880 = vunpack.c.l.b16 %v807
          %v881 = vunpack.c.l.b16 %v808
          %v882 = vunpack.c.l.b16 %v809
          %v883 = vunpack.c.l.b16 %v810
          %v884 = vunpack.c.l.b16 %v811
          %v885 = vunpack.c.l.b16 %v812
          %v886 = vunpack.c.l.b16 %v813
          %v887 = vunpack.c.l.b16 %v814
          %v888 = vunpack.c.l.b16 %v815
          %v889 = vunpack.c.l.b16 %v816
          %v890 = vunpack.c.l.b16 %v817
          %v891 = vunpack.c.l.b16 %v818
          %v892 = vunpack.c.l.b16 %v819
          %v893 = vunpack.c.l.b16 %v820
          %v894 = vunpack.c.l.b16 %v821
          %v895 = vunpack.c.l.b16 %v822
          %v896 = vpack.c.b16 %v865, %v864
          %v897 = vpack.c.b16 %v867, %v866
          %v898 = vpack.c.b16 %v869, %v868
          %v899 = vpack.c.b16 %v871, %v870
          %v900 = vpack.c.b16 %v873, %v872
          %v901 = vpack.c.b16 %v875, %v874
          %v902 = vpack.c.b16 %v877, %v876
          %v903 = vpack.c.b16 %v879, %v878
          %v904 = vpack.c.b16 %v881, %v880
          %v905 = vpack.c.b16 %v883, %v882
          %v906 = vpack.c.b16 %v885, %v884
          %v907 = vpack.c.b16 %v887, %v886
          %v908 = vpack.c.b16 %v889, %v888
          %v909 = vpack.c.b16 %v891, %v890
          %v910 = vpack.c.b16 %v893, %v892
          %v911 = vpack.c.b16 %v895, %v894
          %928 = vmatprep.subr.bf16.mxu0 0
          %929 = vmatpush1.bf16.msra.mxu0 %v896
          %930 = vmatprep.subr.bf16.mxu0 0
          %931 = vmatpush1.bf16.msra.mxu0 %v897
          %932 = vmatprep.subr.bf16.mxu0 0
          %933 = vmatpush1.bf16.msra.mxu0 %v898
          %934 = vmatprep.subr.bf16.mxu0 0
          %935 = vmatpush1.bf16.msra.mxu0 %v899
          %936 = vmatprep.subr.bf16.mxu0 0
          %937 = vmatpush1.bf16.msra.mxu0 %v900
          %938 = vmatprep.subr.bf16.mxu0 0
          %939 = vmatpush1.bf16.msra.mxu0 %v901
          %940 = vmatprep.subr.bf16.mxu0 0
          %941 = vmatpush1.bf16.msra.mxu0 %v902
          %942 = vmatprep.subr.bf16.mxu0 0
          %943 = vmatpush1.bf16.msra.mxu0 %v903
          %944 = vmatprep.subr.bf16.mxu0 0
          %945 = vmatpush1.bf16.msra.mxu0 %v904
          %946 = vmatprep.subr.bf16.mxu0 0
          %947 = vmatpush1.bf16.msra.mxu0 %v905
          %948 = vmatprep.subr.bf16.mxu0 0
          %949 = vmatpush1.bf16.msra.mxu0 %v906
          %950 = vmatprep.subr.bf16.mxu0 0
          %951 = vmatpush1.bf16.msra.mxu0 %v907
          %952 = vmatprep.subr.bf16.mxu0 0
          %953 = vmatpush1.bf16.msra.mxu0 %v908
          %954 = vmatprep.subr.bf16.mxu0 0
          %955 = vmatpush1.bf16.msra.mxu0 %v909
          %956 = vmatprep.subr.bf16.mxu0 0
          %957 = vmatpush1.bf16.msra.mxu0 %v910
          %958 = vmatprep.subr.bf16.mxu0 0
          %959 = vmatpush1.bf16.msra.mxu0 %v911
          %960 = vmatprep.mubr.bf16.mxu0 %v824
          %961 = vmatmul.mubr.bf16.gmra.mrb[0].mxu0 %v823
          %v962 = vpop.f32.mrb[0].mxu0
          %v963 = vadd.f32 %v830, %v962
          %v964 = vpop.f32.mrb[0].mxu0
          %v965 = vpop.f32.mrb[0].mxu0
          %v966 = vadd.f32 %v830, %v965
          %v967 = vpop.f32.mrb[0].mxu0
          %968 = vdwg.mxu0
          %v969 = vadd.f32 %v963, %v966
          %v970 = vrot.slane %v969, 4
          %v971 = vadd.f32 %v969, %v970
          %v972 = vrot.slane %v971, 2
          %v973 = vadd.f32 %v971, %v972
          %v974 = vrot.slane %v973, 1
          %v975 = vadd.f32 %v973, %v974
          %v976 = vrcp.pop 16.0
          %v977 = vmul.f32 %v975, %v976
          %v978 = vsub.f32 %v963, %v977
          %v979 = vsub.f32 %v966, %v977
          %v980 = vmul.f32 %v978, %v978
          %v981 = vmul.f32 %v979, %v979
          %v982 = vadd.f32 %v980, %v981
          %v983 = vrot.slane %v982, 4
          %v984 = vadd.f32 %v982, %v983
          %v985 = vrot.slane %v984, 2
          %v986 = vadd.f32 %v984, %v985
          %v987 = vrot.slane %v986, 1
          %v988 = vadd.f32 %v986, %v987
          %v989 = vld [vmem:[#allocation4] sm:$0x1]
          %s990 = scalar_select %p571, 1, 0
          %v991 = vstv %s990
          %vm992 = vcmp.eq.s32.totalorder %v991, 1
          %v993 = vsel %vm992, 0.0, %v989
          %v994 = vld [vmem:[#allocation5] sm:$0x1]
          %v995 = vsel %vm992, 0.0, %v994
          %s996 = smul.u32 %s42, 16
          %s997 = scvt.s32.f32 %s996
          %s998 = sadd.f32 %s997, 16.0
          %v999 = vsub.f32 %v977, %v993
          %v1000 = vstv %s998
          %v1001 = vrcp.pop %v1000
          %s1002 = vtos %v1001
          %s1003 = smul.f32 16.0, %s1002
          %v1004 = vstv %s1003
          %v1005 = vmul.f32 %v999, %v1004
          %v1006 = vadd.f32 %v993, %v1005
          %1007 = vst [vmem:[#allocation4] sm:$0x1] %v1006
          %v1008 = vadd.f32 %v995, %v988
          %v1009 = vmul.f32 %v999, %v999
          %s1010 = smul.f32 %s997, 16.0
          %v1011 = vstv %s998
          %v1012 = vrcp.pop %v1011
          %s1013 = vtos %v1012
          %s1014 = smul.f32 %s1010, %s1013
          %v1015 = vstv %s1014
          %v1016 = vmul.f32 %v1009, %v1015
          %v1017 = vadd.f32 %v1008, %v1016
          %1018 = vst [vmem:[#allocation5] sm:$0x1] %v1017
        $region112: #{tpu_custom_call.1} parent=59 // pred_fallthru
          _
        %p1019 = pnand %p743, %p570
        %p1020 = pneg %p1019
        // Predicated region
        $region113: #{tpu_custom_call.1} parent=59 // pred_check
          _
        $region114: #{tpu_custom_call.1} parent=59 // pred_check_branch
          %1022 = sbr.rel (%p1019) target = $region116
        $region115: #{tpu_custom_call.1} parent=59 // pred_region
          %v1023 = vld [vmem:[#allocation5] sm:$0x1]
          %v1024 = vmul.f32 %v1023, 0.015625
          %v1025 = vadd.f32 %v1024, 1e-05
          %v1026 = vrsqrt.pop %v1025
          %1027 = vst [vmem:[#allocation5] sm:$0x1] %v1026
        $region116: #{tpu_custom_call.1} parent=59 // pred_fallthru
          _
        %p1028 = scmp.eq.s32.totalorder %s41, 2
        // Predicated region
        $region117: #{tpu_custom_call.1} parent=59 // pred_check
          %p1029 = pneg %p1028
        $region118: #{tpu_custom_call.1} parent=59 // pred_check_branch
          %1031 = sbr.rel (%p1029) target = $region120
        $region119: #{tpu_custom_call.1} parent=59 // pred_region
          %v1032 = vld [vmem:[%s481] sm:$0xff]
          %v1033 = vld [vmem:[%s481 + $0x8] sm:$0xff]
          %v1034 = vld [vmem:[%s481 + $0x10] sm:$0xff]
          %v1035 = vld [vmem:[%s481 + $0x18] sm:$0xff]
          %v1036 = vld [vmem:[%s490] sm:$0xff]
          %v1037 = vld [vmem:[%s490 + $0x8] sm:$0xff]
          %v1038 = vld [vmem:[%s490 + $0x10] sm:$0xff]
          %v1039 = vld [vmem:[%s490 + $0x18] sm:$0xff]
          %v1040 = vmul.f32 %v1032, %v1036
          %v1041 = vmul.f32 %v1033, %v1037
          %v1042 = vmul.f32 %v1034, %v1038
          %v1043 = vmul.f32 %v1035, %v1039
          %v1044 = vld [vmem:[#allocation2] sm:$0x3]
          %v1046 = vlaneseq
          %v1047 = vshrl.u32 %v1046, 7
          %v1048 = vsub.s32 0, %v1047
          %v1049 = vrot.slane %v1044, %v1048
          %v1050 = vlaneseq
          %v1051 = vshrl.u32 %v1050, 7
          %v1052 = vsub.s32 1, %v1051
          %v1053 = vrot.slane %v1044, %v1052
          %v1056 = vsub.f32 %v1040, %v1049
          %v1057 = vsub.f32 %v1041, %v1053
          %v1058 = vsub.f32 %v1042, %v1049
          %v1059 = vsub.f32 %v1043, %v1053
          %v1060 = vld [vmem:[#allocation3] sm:$0x3]
          %v1062 = vlaneseq
          %v1063 = vshrl.u32 %v1062, 7
          %v1064 = vsub.s32 0, %v1063
          %v1065 = vrot.slane %v1060, %v1064
          %v1066 = vlaneseq
          %v1067 = vshrl.u32 %v1066, 7
          %v1068 = vsub.s32 1, %v1067
          %v1069 = vrot.slane %v1060, %v1068
          %v1072 = vmul.f32 %v1056, %v1065
          %v1073 = vmul.f32 %v1057, %v1069
          %v1074 = vmul.f32 %v1058, %v1065
          %v1075 = vmul.f32 %v1059, %v1069
          %v1076 = vld [vmem:[#allocation15] sm:$0xf]
          %v1077 = vld [vmem:[#allocation15 + $0x4] sm:$0xf]
          %v1078 = vld [vmem:[#allocation15 + $0x8] sm:$0xf]
          %v1079 = vld [vmem:[#allocation15 + $0xc] sm:$0xf]
          %v1080 = vld [vmem:[#allocation15 + $0x10] sm:$0xf]
          %v1081 = vld [vmem:[#allocation15 + $0x14] sm:$0xf]
          %v1082 = vld [vmem:[#allocation15 + $0x18] sm:$0xf]
          %v1083 = vld [vmem:[#allocation15 + $0x1c] sm:$0xf]
          %v1084 = vld [vmem:[#allocation15 + $0x20] sm:$0xf]
          %v1085 = vld [vmem:[#allocation15 + $0x24] sm:$0xf]
          %v1086 = vld [vmem:[#allocation15 + $0x28] sm:$0xf]
          %v1087 = vld [vmem:[#allocation15 + $0x2c] sm:$0xf]
          %v1088 = vld [vmem:[#allocation15 + $0x30] sm:$0xf]
          %v1089 = vld [vmem:[#allocation15 + $0x34] sm:$0xf]
          %v1090 = vld [vmem:[#allocation15 + $0x38] sm:$0xf]
          %v1091 = vld [vmem:[#allocation15 + $0x3c] sm:$0xf]
          %v1092 = vld [vmem:[#allocation15 + $0x40] sm:$0xf]
          %v1093 = vld [vmem:[#allocation15 + $0x44] sm:$0xf]
          %v1094 = vld [vmem:[#allocation15 + $0x48] sm:$0xf]
          %v1095 = vld [vmem:[#allocation15 + $0x4c] sm:$0xf]
          %v1096 = vld [vmem:[#allocation15 + $0x50] sm:$0xf]
          %v1097 = vld [vmem:[#allocation15 + $0x54] sm:$0xf]
          %v1098 = vld [vmem:[#allocation15 + $0x58] sm:$0xf]
          %v1099 = vld [vmem:[#allocation15 + $0x5c] sm:$0xf]
          %v1100 = vld [vmem:[#allocation15 + $0x60] sm:$0xf]
          %v1101 = vld [vmem:[#allocation15 + $0x64] sm:$0xf]
          %v1102 = vld [vmem:[#allocation15 + $0x68] sm:$0xf]
          %v1103 = vld [vmem:[#allocation15 + $0x6c] sm:$0xf]
          %v1104 = vld [vmem:[#allocation15 + $0x70] sm:$0xf]
          %v1105 = vld [vmem:[#allocation15 + $0x74] sm:$0xf]
          %v1106 = vld [vmem:[#allocation15 + $0x78] sm:$0xf]
          %v1107 = vld [vmem:[#allocation15 + $0x7c] sm:$0xf]
          %v1108 = vpack.c.bf16 %v1074, %v1072
          %v1109 = vpack.c.bf16 %v1075, %v1073
          %v1110 = vld [vmem:[#allocation16] sm:$0x1]
          %v1112 = vlaneseq
          %v1113 = vshrl.u32 %v1112, 7
          %v1114 = vsub.s32 0, %v1113
          %v1115 = vrot.slane %v1110, %v1114
          %v1149 = vunpack.c.l.b16 %v1076
          %v1150 = vunpack.c.l.b16 %v1077
          %v1151 = vunpack.c.l.b16 %v1078
          %v1152 = vunpack.c.l.b16 %v1079
          %v1153 = vunpack.c.l.b16 %v1080
          %v1154 = vunpack.c.l.b16 %v1081
          %v1155 = vunpack.c.l.b16 %v1082
          %v1156 = vunpack.c.l.b16 %v1083
          %v1157 = vunpack.c.l.b16 %v1084
          %v1158 = vunpack.c.l.b16 %v1085
          %v1159 = vunpack.c.l.b16 %v1086
          %v1160 = vunpack.c.l.b16 %v1087
          %v1161 = vunpack.c.l.b16 %v1088
          %v1162 = vunpack.c.l.b16 %v1089
          %v1163 = vunpack.c.l.b16 %v1090
          %v1164 = vunpack.c.l.b16 %v1091
          %v1165 = vunpack.c.l.b16 %v1092
          %v1166 = vunpack.c.l.b16 %v1093
          %v1167 = vunpack.c.l.b16 %v1094
          %v1168 = vunpack.c.l.b16 %v1095
          %v1169 = vunpack.c.l.b16 %v1096
          %v1170 = vunpack.c.l.b16 %v1097
          %v1171 = vunpack.c.l.b16 %v1098
          %v1172 = vunpack.c.l.b16 %v1099
          %v1173 = vunpack.c.l.b16 %v1100
          %v1174 = vunpack.c.l.b16 %v1101
          %v1175 = vunpack.c.l.b16 %v1102
          %v1176 = vunpack.c.l.b16 %v1103
          %v1177 = vunpack.c.l.b16 %v1104
          %v1178 = vunpack.c.l.b16 %v1105
          %v1179 = vunpack.c.l.b16 %v1106
          %v1180 = vunpack.c.l.b16 %v1107
          %v1181 = vpack.c.b16 %v1150, %v1149
          %v1182 = vpack.c.b16 %v1152, %v1151
          %v1183 = vpack.c.b16 %v1154, %v1153
          %v1184 = vpack.c.b16 %v1156, %v1155
          %v1185 = vpack.c.b16 %v1158, %v1157
          %v1186 = vpack.c.b16 %v1160, %v1159
          %v1187 = vpack.c.b16 %v1162, %v1161
          %v1188 = vpack.c.b16 %v1164, %v1163
          %v1189 = vpack.c.b16 %v1166, %v1165
          %v1190 = vpack.c.b16 %v1168, %v1167
          %v1191 = vpack.c.b16 %v1170, %v1169
          %v1192 = vpack.c.b16 %v1172, %v1171
          %v1193 = vpack.c.b16 %v1174, %v1173
          %v1194 = vpack.c.b16 %v1176, %v1175
          %v1195 = vpack.c.b16 %v1178, %v1177
          %v1196 = vpack.c.b16 %v1180, %v1179
          %1213 = vmatprep.subr.bf16.mxu0 0
          %1214 = vmatpush1.bf16.msra.mxu0 %v1181
          %1215 = vmatprep.subr.bf16.mxu0 0
          %1216 = vmatpush1.bf16.msra.mxu0 %v1182
          %1217 = vmatprep.subr.bf16.mxu0 0
          %1218 = vmatpush1.bf16.msra.mxu0 %v1183
          %1219 = vmatprep.subr.bf16.mxu0 0
          %1220 = vmatpush1.bf16.msra.mxu0 %v1184
          %1221 = vmatprep.subr.bf16.mxu0 0
          %1222 = vmatpush1.bf16.msra.mxu0 %v1185
          %1223 = vmatprep.subr.bf16.mxu0 0
          %1224 = vmatpush1.bf16.msra.mxu0 %v1186
          %1225 = vmatprep.subr.bf16.mxu0 0
          %1226 = vmatpush1.bf16.msra.mxu0 %v1187
          %1227 = vmatprep.subr.bf16.mxu0 0
          %1228 = vmatpush1.bf16.msra.mxu0 %v1188
          %1229 = vmatprep.subr.bf16.mxu0 0
          %1230 = vmatpush1.bf16.msra.mxu0 %v1189
          %1231 = vmatprep.subr.bf16.mxu0 0
          %1232 = vmatpush1.bf16.msra.mxu0 %v1190
          %1233 = vmatprep.subr.bf16.mxu0 0
          %1234 = vmatpush1.bf16.msra.mxu0 %v1191
          %1235 = vmatprep.subr.bf16.mxu0 0
          %1236 = vmatpush1.bf16.msra.mxu0 %v1192
          %1237 = vmatprep.subr.bf16.mxu0 0
          %1238 = vmatpush1.bf16.msra.mxu0 %v1193
          %1239 = vmatprep.subr.bf16.mxu0 0
          %1240 = vmatpush1.bf16.msra.mxu0 %v1194
          %1241 = vmatprep.subr.bf16.mxu0 0
          %1242 = vmatpush1.bf16.msra.mxu0 %v1195
          %1243 = vmatprep.subr.bf16.mxu0 0
          %1244 = vmatpush1.bf16.msra.mxu0 %v1196
          %1245 = vmatprep.mubr.bf16.mxu0 %v1109
          %1246 = vmatmul.mubr.bf16.gmra.mrb[0].mxu0 %v1108
          %v1247 = vpop.f32.mrb[0].mxu0
          %v1248 = vadd.f32 %v1115, %v1247
          %v1249 = vpop.f32.mrb[0].mxu0
          %v1250 = vpop.f32.mrb[0].mxu0
          %v1251 = vadd.f32 %v1115, %v1250
          %v1252 = vpop.f32.mrb[0].mxu0
          %1253 = vdwg.mxu0
          %v1254 = vld [vmem:[#allocation4] sm:$0x1]
          %v1256 = vlaneseq
          %v1257 = vshrl.u32 %v1256, 7
          %v1258 = vsub.s32 0, %v1257
          %v1259 = vrot.slane %v1254, %v1258
          %v1261 = vsub.f32 %v1248, %v1259
          %v1262 = vsub.f32 %v1251, %v1259
          %v1263 = vld [vmem:[#allocation5] sm:$0x1]
          %v1265 = vlaneseq
          %v1266 = vshrl.u32 %v1265, 7
          %v1267 = vsub.s32 0, %v1266
          %v1268 = vrot.slane %v1263, %v1267
          %v1270 = vmul.f32 %v1261, %v1268
          %v1271 = vmul.f32 %v1262, %v1268
          %v1272 = vmul.f32 %v1270, 0.5
          %v1273 = vmul.f32 %v1271, 0.5
          %v1274 = vmul.f32 %v1270, 0.044715
          %v1275 = vmul.f32 %v1271, 0.044715
          %v1276 = vmul.f32 %v1274, %v1270
          %v1277 = vmul.f32 %v1275, %v1271
          %v1278 = vmul.f32 %v1276, %v1270
          %v1279 = vmul.f32 %v1277, %v1271
          %v1280 = vadd.f32 %v1270, %v1278
          %v1281 = vadd.f32 %v1271, %v1279
          %v1282 = vmul.f32 %v1280, 0.7978846
          %v1283 = vmul.f32 %v1281, 0.7978846
          %v1284 = vtanh.pop %v1282
          %v1285 = vtanh.pop %v1283
          %v1286 = vadd.f32 %v1284, 1.0
          %v1287 = vadd.f32 %v1285, 1.0
          %v1288 = vmul.f32 %v1272, %v1286
          %v1289 = vmul.f32 %v1273, %v1287
          %v1290 = vld [vmem:[#allocation18] sm:$0xf]
          %v1291 = vld [vmem:[#allocation18 + $0x4] sm:$0xf]
          %v1292 = vld [vmem:[#allocation18 + $0x8] sm:$0xf]
          %v1293 = vld [vmem:[#allocation18 + $0xc] sm:$0xf]
          %v1294 = vld [vmem:[#allocation18 + $0x10] sm:$0xf]
          %v1295 = vld [vmem:[#allocation18 + $0x14] sm:$0xf]
          %v1296 = vld [vmem:[#allocation18 + $0x18] sm:$0xf]
          %v1297 = vld [vmem:[#allocation18 + $0x1c] sm:$0xf]
          %v1298 = vld [vmem:[#allocation18 + $0x20] sm:$0xf]
          %v1299 = vld [vmem:[#allocation18 + $0x24] sm:$0xf]
          %v1300 = vld [vmem:[#allocation18 + $0x28] sm:$0xf]
          %v1301 = vld [vmem:[#allocation18 + $0x2c] sm:$0xf]
          %v1302 = vld [vmem:[#allocation18 + $0x30] sm:$0xf]
          %v1303 = vld [vmem:[#allocation18 + $0x34] sm:$0xf]
          %v1304 = vld [vmem:[#allocation18 + $0x38] sm:$0xf]
          %v1305 = vld [vmem:[#allocation18 + $0x3c] sm:$0xf]
          %v1306 = vpack.c.bf16 %v1289, %v1288
          %v1307 = vld [vmem:[#allocation19] sm:$0x1]
          %v1309 = vlaneseq
          %v1310 = vshrl.u32 %v1309, 7
          %v1311 = vsub.s32 0, %v1310
          %v1312 = vrot.slane %v1307, %v1311
          %v1330 = vunpack.c.l.b16 %v1290
          %v1331 = vunpack.c.l.b16 %v1291
          %v1332 = vunpack.c.l.b16 %v1292
          %v1333 = vunpack.c.l.b16 %v1293
          %v1334 = vunpack.c.l.b16 %v1294
          %v1335 = vunpack.c.l.b16 %v1295
          %v1336 = vunpack.c.l.b16 %v1296
          %v1337 = vunpack.c.l.b16 %v1297
          %v1338 = vunpack.c.l.b16 %v1298
          %v1339 = vunpack.c.l.b16 %v1299
          %v1340 = vunpack.c.l.b16 %v1300
          %v1341 = vunpack.c.l.b16 %v1301
          %v1342 = vunpack.c.l.b16 %v1302
          %v1343 = vunpack.c.l.b16 %v1303
          %v1344 = vunpack.c.l.b16 %v1304
          %v1345 = vunpack.c.l.b16 %v1305
          %v1346 = vpack.c.b16 %v1331, %v1330
          %v1347 = vpack.c.b16 %v1333, %v1332
          %v1348 = vpack.c.b16 %v1335, %v1334
          %v1349 = vpack.c.b16 %v1337, %v1336
          %v1350 = vpack.c.b16 %v1339, %v1338
          %v1351 = vpack.c.b16 %v1341, %v1340
          %v1352 = vpack.c.b16 %v1343, %v1342
          %v1353 = vpack.c.b16 %v1345, %v1344
          %1362 = vmatprep.subr.bf16.mxu0 0
          %1363 = vmatpush1.bf16.msra.mxu0 %v1346
          %1364 = vmatprep.subr.bf16.mxu0 0
          %1365 = vmatpush1.bf16.msra.mxu0 %v1347
          %1366 = vmatprep.subr.bf16.mxu0 0
          %1367 = vmatpush1.bf16.msra.mxu0 %v1348
          %1368 = vmatprep.subr.bf16.mxu0 0
          %1369 = vmatpush1.bf16.msra.mxu0 %v1349
          %1370 = vmatprep.subr.bf16.mxu0 0
          %1371 = vmatpush1.bf16.msra.mxu0 %v1350
          %1372 = vmatprep.subr.bf16.mxu0 0
          %1373 = vmatpush1.bf16.msra.mxu0 %v1351
          %1374 = vmatprep.subr.bf16.mxu0 0
          %1375 = vmatpush1.bf16.msra.mxu0 %v1352
          %1376 = vmatprep.subr.bf16.mxu0 0
          %1377 = vmatpush1.bf16.msra.mxu0 %v1353
          %1378 = vmatprep.subr.bf16.mxu0 0
          %1379 = vmatpush1.bf16.msra.mxu0 0
          %1380 = vmatprep.subr.bf16.mxu0 0
          %1381 = vmatpush1.bf16.msra.mxu0 0
          %1382 = vmatprep.subr.bf16.mxu0 0
          %1383 = vmatpush1.bf16.msra.mxu0 0
          %1384 = vmatprep.subr.bf16.mxu0 0
          %1385 = vmatpush1.bf16.msra.mxu0 0
          %1386 = vmatprep.subr.bf16.mxu0 0
          %1387 = vmatpush1.bf16.msra.mxu0 0
          %1388 = vmatprep.subr.bf16.mxu0 0
          %1389 = vmatpush1.bf16.msra.mxu0 0
          %1390 = vmatprep.subr.bf16.mxu0 0
          %1391 = vmatpush1.bf16.msra.mxu0 0
          %1392 = vmatprep.subr.bf16.mxu0 0
          %1393 = vmatpush1.bf16.msra.mxu0 0
          %1394 = vmatprep.mubr.bf16.mxu0 0
          %1395 = vmatmul.mubr.bf16.gmra.mrb[0].mxu0 %v1306
          %v1396 = vpop.f32.mrb[0].mxu0
          %v1397 = vadd.f32 %v1312, %v1396
          %v1398 = vpop.f32.mrb[0].mxu0
          %v1399 = vpop.f32.mrb[0].mxu0
          %v1400 = vadd.f32 %v1312, %v1399
          %v1401 = vpop.f32.mrb[0].mxu0
          %1402 = vdwg.mxu0
          %v1403 = vadd.f32 %v1397, %v1400
          %v1404 = vrot.slane %v1403, 4
          %v1405 = vadd.f32 %v1403, %v1404
          %v1406 = vrot.slane %v1405, 2
          %v1407 = vadd.f32 %v1405, %v1406
          %v1408 = vrot.slane %v1407, 1
          %v1409 = vadd.f32 %v1407, %v1408
          %v1410 = vrcp.pop 16.0
          %v1411 = vmul.f32 %v1409, %v1410
          %v1412 = vsub.f32 %v1397, %v1411
          %v1413 = vsub.f32 %v1400, %v1411
          %v1414 = vmul.f32 %v1412, %v1412
          %v1415 = vmul.f32 %v1413, %v1413
          %v1416 = vadd.f32 %v1414, %v1415
          %v1417 = vrot.slane %v1416, 4
          %v1418 = vadd.f32 %v1416, %v1417
          %v1419 = vrot.slane %v1418, 2
          %v1420 = vadd.f32 %v1418, %v1419
          %v1421 = vrot.slane %v1420, 1
          %v1422 = vadd.f32 %v1420, %v1421
          %v1423 = vld [vmem:[#allocation6] sm:$0x1]
          %s1424 = scalar_select %p571, 1, 0
          %v1425 = vstv %s1424
          %vm1426 = vcmp.eq.s32.totalorder %v1425, 1
          %v1427 = vsel %vm1426, 0.0, %v1423
          %v1428 = vld [vmem:[#allocation7] sm:$0x1]
          %v1429 = vsel %vm1426, 0.0, %v1428
          %s1430 = smul.u32 %s42, 16
          %s1431 = scvt.s32.f32 %s1430
          %s1432 = sadd.f32 %s1431, 16.0
          %v1433 = vsub.f32 %v1411, %v1427
          %v1434 = vstv %s1432
          %v1435 = vrcp.pop %v1434
          %s1436 = vtos %v1435
          %s1437 = smul.f32 16.0, %s1436
          %v1438 = vstv %s1437
          %v1439 = vmul.f32 %v1433, %v1438
          %v1440 = vadd.f32 %v1427, %v1439
          %1441 = vst [vmem:[#allocation6] sm:$0x1] %v1440
          %v1442 = vadd.f32 %v1429, %v1422
          %v1443 = vmul.f32 %v1433, %v1433
          %s1444 = smul.f32 %s1431, 16.0
          %v1445 = vstv %s1432
          %v1446 = vrcp.pop %v1445
          %s1447 = vtos %v1446
          %s1448 = smul.f32 %s1444, %s1447
          %v1449 = vstv %s1448
          %v1450 = vmul.f32 %v1443, %v1449
          %v1451 = vadd.f32 %v1442, %v1450
          %1452 = vst [vmem:[#allocation7] sm:$0x1] %v1451
          %v1453 = vld [vmem:[#allocation21] sm:$0xf]
          %v1454 = vld [vmem:[#allocation21 + $0x4] sm:$0xf]
          %v1455 = vld [vmem:[#allocation21 + $0x8] sm:$0xf]
          %v1456 = vld [vmem:[#allocation21 + $0xc] sm:$0xf]
          %v1457 = vld [vmem:[#allocation21 + $0x10] sm:$0xf]
          %v1458 = vld [vmem:[#allocation21 + $0x14] sm:$0xf]
          %v1459 = vld [vmem:[#allocation21 + $0x18] sm:$0xf]
          %v1460 = vld [vmem:[#allocation21 + $0x1c] sm:$0xf]
          %v1461 = vld [vmem:[#allocation21 + $0x20] sm:$0xf]
          %v1462 = vld [vmem:[#allocation21 + $0x24] sm:$0xf]
          %v1463 = vld [vmem:[#allocation21 + $0x28] sm:$0xf]
          %v1464 = vld [vmem:[#allocation21 + $0x2c] sm:$0xf]
          %v1465 = vld [vmem:[#allocation21 + $0x30] sm:$0xf]
          %v1466 = vld [vmem:[#allocation21 + $0x34] sm:$0xf]
          %v1467 = vld [vmem:[#allocation21 + $0x38] sm:$0xf]
          %v1468 = vld [vmem:[#allocation21 + $0x3c] sm:$0xf]
          %v1469 = vpack.c.bf16 %v1400, %v1397
          %v1470 = vld [vmem:[#allocation22] sm:$0x1]
          %v1472 = vlaneseq
          %v1473 = vshrl.u32 %v1472, 7
          %v1474 = vsub.s32 0, %v1473
          %v1475 = vrot.slane %v1470, %v1474
          %v1493 = vunpack.c.l.b16 %v1453
          %v1494 = vunpack.c.l.b16 %v1454
          %v1495 = vunpack.c.l.b16 %v1455
          %v1496 = vunpack.c.l.b16 %v1456
          %v1497 = vunpack.c.l.b16 %v1457
          %v1498 = vunpack.c.l.b16 %v1458
          %v1499 = vunpack.c.l.b16 %v1459
          %v1500 = vunpack.c.l.b16 %v1460
          %v1501 = vunpack.c.l.b16 %v1461
          %v1502 = vunpack.c.l.b16 %v1462
          %v1503 = vunpack.c.l.b16 %v1463
          %v1504 = vunpack.c.l.b16 %v1464
          %v1505 = vunpack.c.l.b16 %v1465
          %v1506 = vunpack.c.l.b16 %v1466
          %v1507 = vunpack.c.l.b16 %v1467
          %v1508 = vunpack.c.l.b16 %v1468
          %v1509 = vpack.c.b16 %v1494, %v1493
          %v1510 = vpack.c.b16 %v1496, %v1495
          %v1511 = vpack.c.b16 %v1498, %v1497
          %v1512 = vpack.c.b16 %v1500, %v1499
          %v1513 = vpack.c.b16 %v1502, %v1501
          %v1514 = vpack.c.b16 %v1504, %v1503
          %v1515 = vpack.c.b16 %v1506, %v1505
          %v1516 = vpack.c.b16 %v1508, %v1507
          %1525 = vmatprep.subr.bf16.mxu0 0
          %1526 = vmatpush1.bf16.msra.mxu0 %v1509
          %1527 = vmatprep.subr.bf16.mxu0 0
          %1528 = vmatpush1.bf16.msra.mxu0 %v1510
          %1529 = vmatprep.subr.bf16.mxu0 0
          %1530 = vmatpush1.bf16.msra.mxu0 %v1511
          %1531 = vmatprep.subr.bf16.mxu0 0
          %1532 = vmatpush1.bf16.msra.mxu0 %v1512
          %1533 = vmatprep.subr.bf16.mxu0 0
          %1534 = vmatpush1.bf16.msra.mxu0 %v1513
          %1535 = vmatprep.subr.bf16.mxu0 0
          %1536 = vmatpush1.bf16.msra.mxu0 %v1514
          %1537 = vmatprep.subr.bf16.mxu0 0
          %1538 = vmatpush1.bf16.msra.mxu0 %v1515
          %1539 = vmatprep.subr.bf16.mxu0 0
          %1540 = vmatpush1.bf16.msra.mxu0 %v1516
          %1541 = vmatprep.subr.bf16.mxu0 0
          %1542 = vmatpush1.bf16.msra.mxu0 0
          %1543 = vmatprep.subr.bf16.mxu0 0
          %1544 = vmatpush1.bf16.msra.mxu0 0
          %1545 = vmatprep.subr.bf16.mxu0 0
          %1546 = vmatpush1.bf16.msra.mxu0 0
          %1547 = vmatprep.subr.bf16.mxu0 0
          %1548 = vmatpush1.bf16.msra.mxu0 0
          %1549 = vmatprep.subr.bf16.mxu0 0
          %1550 = vmatpush1.bf16.msra.mxu0 0
          %1551 = vmatprep.subr.bf16.mxu0 0
          %1552 = vmatpush1.bf16.msra.mxu0 0
          %1553 = vmatprep.subr.bf16.mxu0 0
          %1554 = vmatpush1.bf16.msra.mxu0 0
          %1555 = vmatprep.subr.bf16.mxu0 0
          %1556 = vmatpush1.bf16.msra.mxu0 0
          %1557 = vmatprep.mubr.bf16.mxu0 0
          %1558 = vmatmul.mubr.bf16.gmra.mrb[0].mxu0 %v1469
          %v1559 = vpop.f32.mrb[0].mxu0
          %v1560 = vadd.f32 %v1475, %v1559
          %v1561 = vpop.f32.mrb[0].mxu0
          %v1562 = vpop.f32.mrb[0].mxu0
          %v1563 = vadd.f32 %v1475, %v1562
          %v1564 = vpop.f32.mrb[0].mxu0
          %1565 = vdwg.mxu0
          %v1566 = vadd.f32 %v1560, %v1563
          %v1567 = vrot.slane %v1566, 4
          %v1568 = vadd.f32 %v1566, %v1567
          %v1569 = vrot.slane %v1568, 2
          %v1570 = vadd.f32 %v1568, %v1569
          %v1571 = vrot.slane %v1570, 1
          %v1572 = vadd.f32 %v1570, %v1571
          %v1573 = vmul.f32 %v1572, %v1410
          %v1574 = vsub.f32 %v1560, %v1573
          %v1575 = vsub.f32 %v1563, %v1573
          %v1576 = vmul.f32 %v1574, %v1574
          %v1577 = vmul.f32 %v1575, %v1575
          %v1578 = vadd.f32 %v1576, %v1577
          %v1579 = vrot.slane %v1578, 4
          %v1580 = vadd.f32 %v1578, %v1579
          %v1581 = vrot.slane %v1580, 2
          %v1582 = vadd.f32 %v1580, %v1581
          %v1583 = vrot.slane %v1582, 1
          %v1584 = vadd.f32 %v1582, %v1583
          %v1585 = vld [vmem:[#allocation8] sm:$0x1]
          %v1586 = vsel %vm1426, 0.0, %v1585
          %v1587 = vld [vmem:[#allocation9] sm:$0x1]
          %v1588 = vsel %vm1426, 0.0, %v1587
          %v1589 = vsub.f32 %v1573, %v1586
          %v1590 = vmul.f32 %v1589, %v1438
          %v1591 = vadd.f32 %v1586, %v1590
          %1592 = vst [vmem:[#allocation8] sm:$0x1] %v1591
          %v1593 = vadd.f32 %v1588, %v1584
          %v1594 = vmul.f32 %v1589, %v1589
          %v1595 = vmul.f32 %v1594, %v1449
          %v1596 = vadd.f32 %v1593, %v1595
          %1597 = vst [vmem:[#allocation9] sm:$0x1] %v1596
        $region120: #{tpu_custom_call.1} parent=59 // pred_fallthru
          _
        %p1598 = pnand %p1028, %p570
        %p1599 = pneg %p1598
        // Predicated region
        $region121: #{tpu_custom_call.1} parent=59 // pred_check
          _
        $region122: #{tpu_custom_call.1} parent=59 // pred_check_branch
          %1601 = sbr.rel (%p1598) target = $region124
        $region123: #{tpu_custom_call.1} parent=59 // pred_region
          %v1602 = vld [vmem:[#allocation7] sm:$0x1]
          %v1603 = vmul.f32 %v1602, 0.015625
          %v1604 = vadd.f32 %v1603, 1e-05
          %v1605 = vrsqrt.pop %v1604
          %1606 = vst [vmem:[#allocation7] sm:$0x1] %v1605
          %v1607 = vld [vmem:[#allocation9] sm:$0x1]
          %v1608 = vmul.f32 %v1607, 0.015625
          %v1609 = vadd.f32 %v1608, 1e-05
          %v1610 = vrsqrt.pop %v1609
          %1611 = vst [vmem:[#allocation9] sm:$0x1] %v1610
        $region124: #{tpu_custom_call.1} parent=59 // pred_fallthru
          _
        %p1612 = scmp.eq.s32.totalorder %s41, 3
        // Predicated region
        $region125: #{tpu_custom_call.1} parent=59 // pred_check
          %p1613 = pneg %p1612
        $region126: #{tpu_custom_call.1} parent=59 // pred_check_branch
          %1615 = sbr.rel (%p1613) target = $region128
        $region127: #{tpu_custom_call.1} parent=59 // pred_region
          %v1616 = vld [vmem:[%s481] sm:$0xff]
          %v1617 = vld [vmem:[%s481 + $0x8] sm:$0xff]
          %v1618 = vld [vmem:[%s481 + $0x10] sm:$0xff]
          %v1619 = vld [vmem:[%s481 + $0x18] sm:$0xff]
          %v1620 = vld [vmem:[%s490] sm:$0xff]
          %v1621 = vld [vmem:[%s490 + $0x8] sm:$0xff]
          %v1622 = vld [vmem:[%s490 + $0x10] sm:$0xff]
          %v1623 = vld [vmem:[%s490 + $0x18] sm:$0xff]
          %v1624 = vmul.f32 %v1616, %v1620
          %v1625 = vmul.f32 %v1617, %v1621
          %v1626 = vmul.f32 %v1618, %v1622
          %v1627 = vmul.f32 %v1619, %v1623
          %v1628 = vld [vmem:[#allocation2] sm:$0x3]
          %v1630 = vlaneseq
          %v1631 = vshrl.u32 %v1630, 7
          %v1632 = vsub.s32 0, %v1631
          %v1633 = vrot.slane %v1628, %v1632
          %v1634 = vlaneseq
          %v1635 = vshrl.u32 %v1634, 7
          %v1636 = vsub.s32 1, %v1635
          %v1637 = vrot.slane %v1628, %v1636
          %v1640 = vsub.f32 %v1624, %v1633
          %v1641 = vsub.f32 %v1625, %v1637
          %v1642 = vsub.f32 %v1626, %v1633
          %v1643 = vsub.f32 %v1627, %v1637
          %v1644 = vld [vmem:[#allocation3] sm:$0x3]
          %v1646 = vlaneseq
          %v1647 = vshrl.u32 %v1646, 7
          %v1648 = vsub.s32 0, %v1647
          %v1649 = vrot.slane %v1644, %v1648
          %v1650 = vlaneseq
          %v1651 = vshrl.u32 %v1650, 7
          %v1652 = vsub.s32 1, %v1651
          %v1653 = vrot.slane %v1644, %v1652
          %v1656 = vmul.f32 %v1640, %v1649
          %v1657 = vmul.f32 %v1641, %v1653
          %v1658 = vmul.f32 %v1642, %v1649
          %v1659 = vmul.f32 %v1643, %v1653
          %v1660 = vld [vmem:[#allocation15] sm:$0xf]
          %v1661 = vld [vmem:[#allocation15 + $0x4] sm:$0xf]
          %v1662 = vld [vmem:[#allocation15 + $0x8] sm:$0xf]
          %v1663 = vld [vmem:[#allocation15 + $0xc] sm:$0xf]
          %v1664 = vld [vmem:[#allocation15 + $0x10] sm:$0xf]
          %v1665 = vld [vmem:[#allocation15 + $0x14] sm:$0xf]
          %v1666 = vld [vmem:[#allocation15 + $0x18] sm:$0xf]
          %v1667 = vld [vmem:[#allocation15 + $0x1c] sm:$0xf]
          %v1668 = vld [vmem:[#allocation15 + $0x20] sm:$0xf]
          %v1669 = vld [vmem:[#allocation15 + $0x24] sm:$0xf]
          %v1670 = vld [vmem:[#allocation15 + $0x28] sm:$0xf]
          %v1671 = vld [vmem:[#allocation15 + $0x2c] sm:$0xf]
          %v1672 = vld [vmem:[#allocation15 + $0x30] sm:$0xf]
          %v1673 = vld [vmem:[#allocation15 + $0x34] sm:$0xf]
          %v1674 = vld [vmem:[#allocation15 + $0x38] sm:$0xf]
          %v1675 = vld [vmem:[#allocation15 + $0x3c] sm:$0xf]
          %v1676 = vld [vmem:[#allocation15 + $0x40] sm:$0xf]
          %v1677 = vld [vmem:[#allocation15 + $0x44] sm:$0xf]
          %v1678 = vld [vmem:[#allocation15 + $0x48] sm:$0xf]
          %v1679 = vld [vmem:[#allocation15 + $0x4c] sm:$0xf]
          %v1680 = vld [vmem:[#allocation15 + $0x50] sm:$0xf]
          %v1681 = vld [vmem:[#allocation15 + $0x54] sm:$0xf]
          %v1682 = vld [vmem:[#allocation15 + $0x58] sm:$0xf]
          %v1683 = vld [vmem:[#allocation15 + $0x5c] sm:$0xf]
          %v1684 = vld [vmem:[#allocation15 + $0x60] sm:$0xf]
          %v1685 = vld [vmem:[#allocation15 + $0x64] sm:$0xf]
          %v1686 = vld [vmem:[#allocation15 + $0x68] sm:$0xf]
          %v1687 = vld [vmem:[#allocation15 + $0x6c] sm:$0xf]
          %v1688 = vld [vmem:[#allocation15 + $0x70] sm:$0xf]
          %v1689 = vld [vmem:[#allocation15 + $0x74] sm:$0xf]
          %v1690 = vld [vmem:[#allocation15 + $0x78] sm:$0xf]
          %v1691 = vld [vmem:[#allocation15 + $0x7c] sm:$0xf]
          %v1692 = vpack.c.bf16 %v1658, %v1656
          %v1693 = vpack.c.bf16 %v1659, %v1657
          %v1694 = vld [vmem:[#allocation16] sm:$0x1]
          %v1696 = vlaneseq
          %v1697 = vshrl.u32 %v1696, 7
          %v1698 = vsub.s32 0, %v1697
          %v1699 = vrot.slane %v1694, %v1698
          %v1733 = vunpack.c.l.b16 %v1660
          %v1734 = vunpack.c.l.b16 %v1661
          %v1735 = vunpack.c.l.b16 %v1662
          %v1736 = vunpack.c.l.b16 %v1663
          %v1737 = vunpack.c.l.b16 %v1664
          %v1738 = vunpack.c.l.b16 %v1665
          %v1739 = vunpack.c.l.b16 %v1666
          %v1740 = vunpack.c.l.b16 %v1667
          %v1741 = vunpack.c.l.b16 %v1668
          %v1742 = vunpack.c.l.b16 %v1669
          %v1743 = vunpack.c.l.b16 %v1670
          %v1744 = vunpack.c.l.b16 %v1671
          %v1745 = vunpack.c.l.b16 %v1672
          %v1746 = vunpack.c.l.b16 %v1673
          %v1747 = vunpack.c.l.b16 %v1674
          %v1748 = vunpack.c.l.b16 %v1675
          %v1749 = vunpack.c.l.b16 %v1676
          %v1750 = vunpack.c.l.b16 %v1677
          %v1751 = vunpack.c.l.b16 %v1678
          %v1752 = vunpack.c.l.b16 %v1679
          %v1753 = vunpack.c.l.b16 %v1680
          %v1754 = vunpack.c.l.b16 %v1681
          %v1755 = vunpack.c.l.b16 %v1682
          %v1756 = vunpack.c.l.b16 %v1683
          %v1757 = vunpack.c.l.b16 %v1684
          %v1758 = vunpack.c.l.b16 %v1685
          %v1759 = vunpack.c.l.b16 %v1686
          %v1760 = vunpack.c.l.b16 %v1687
          %v1761 = vunpack.c.l.b16 %v1688
          %v1762 = vunpack.c.l.b16 %v1689
          %v1763 = vunpack.c.l.b16 %v1690
          %v1764 = vunpack.c.l.b16 %v1691
          %v1765 = vpack.c.b16 %v1734, %v1733
          %v1766 = vpack.c.b16 %v1736, %v1735
          %v1767 = vpack.c.b16 %v1738, %v1737
          %v1768 = vpack.c.b16 %v1740, %v1739
          %v1769 = vpack.c.b16 %v1742, %v1741
          %v1770 = vpack.c.b16 %v1744, %v1743
          %v1771 = vpack.c.b16 %v1746, %v1745
          %v1772 = vpack.c.b16 %v1748, %v1747
          %v1773 = vpack.c.b16 %v1750, %v1749
          %v1774 = vpack.c.b16 %v1752, %v1751
          %v1775 = vpack.c.b16 %v1754, %v1753
          %v1776 = vpack.c.b16 %v1756, %v1755
          %v1777 = vpack.c.b16 %v1758, %v1757
          %v1778 = vpack.c.b16 %v1760, %v1759
          %v1779 = vpack.c.b16 %v1762, %v1761
          %v1780 = vpack.c.b16 %v1764, %v1763
          %1797 = vmatprep.subr.bf16.mxu0 0
          %1798 = vmatpush1.bf16.msra.mxu0 %v1765
          %1799 = vmatprep.subr.bf16.mxu0 0
          %1800 = vmatpush1.bf16.msra.mxu0 %v1766
          %1801 = vmatprep.subr.bf16.mxu0 0
          %1802 = vmatpush1.bf16.msra.mxu0 %v1767
          %1803 = vmatprep.subr.bf16.mxu0 0
          %1804 = vmatpush1.bf16.msra.mxu0 %v1768
          %1805 = vmatprep.subr.bf16.mxu0 0
          %1806 = vmatpush1.bf16.msra.mxu0 %v1769
          %1807 = vmatprep.subr.bf16.mxu0 0
          %1808 = vmatpush1.bf16.msra.mxu0 %v1770
          %1809 = vmatprep.subr.bf16.mxu0 0
          %1810 = vmatpush1.bf16.msra.mxu0 %v1771
          %1811 = vmatprep.subr.bf16.mxu0 0
          %1812 = vmatpush1.bf16.msra.mxu0 %v1772
          %1813 = vmatprep.subr.bf16.mxu0 0
          %1814 = vmatpush1.bf16.msra.mxu0 %v1773
          %1815 = vmatprep.subr.bf16.mxu0 0
          %1816 = vmatpush1.bf16.msra.mxu0 %v1774
          %1817 = vmatprep.subr.bf16.mxu0 0
          %1818 = vmatpush1.bf16.msra.mxu0 %v1775
          %1819 = vmatprep.subr.bf16.mxu0 0
          %1820 = vmatpush1.bf16.msra.mxu0 %v1776
          %1821 = vmatprep.subr.bf16.mxu0 0
          %1822 = vmatpush1.bf16.msra.mxu0 %v1777
          %1823 = vmatprep.subr.bf16.mxu0 0
          %1824 = vmatpush1.bf16.msra.mxu0 %v1778
          %1825 = vmatprep.subr.bf16.mxu0 0
          %1826 = vmatpush1.bf16.msra.mxu0 %v1779
          %1827 = vmatprep.subr.bf16.mxu0 0
          %1828 = vmatpush1.bf16.msra.mxu0 %v1780
          %1829 = vmatprep.mubr.bf16.mxu0 %v1693
          %1830 = vmatmul.mubr.bf16.gmra.mrb[0].mxu0 %v1692
          %v1831 = vpop.f32.mrb[0].mxu0
          %v1832 = vadd.f32 %v1699, %v1831
          %v1833 = vpop.f32.mrb[0].mxu0
          %v1834 = vpop.f32.mrb[0].mxu0
          %v1835 = vadd.f32 %v1699, %v1834
          %v1836 = vpop.f32.mrb[0].mxu0
          %1837 = vdwg.mxu0
          %v1838 = vld [vmem:[#allocation4] sm:$0x1]
          %v1840 = vlaneseq
          %v1841 = vshrl.u32 %v1840, 7
          %v1842 = vsub.s32 0, %v1841
          %v1843 = vrot.slane %v1838, %v1842
          %v1845 = vsub.f32 %v1832, %v1843
          %v1846 = vsub.f32 %v1835, %v1843
          %v1847 = vld [vmem:[#allocation5] sm:$0x1]
          %v1849 = vlaneseq
          %v1850 = vshrl.u32 %v1849, 7
          %v1851 = vsub.s32 0, %v1850
          %v1852 = vrot.slane %v1847, %v1851
          %v1854 = vmul.f32 %v1845, %v1852
          %v1855 = vmul.f32 %v1846, %v1852
          %v1856 = vmul.f32 %v1854, 0.5
          %v1857 = vmul.f32 %v1855, 0.5
          %v1858 = vmul.f32 %v1854, 0.044715
          %v1859 = vmul.f32 %v1855, 0.044715
          %v1860 = vmul.f32 %v1858, %v1854
          %v1861 = vmul.f32 %v1859, %v1855
          %v1862 = vmul.f32 %v1860, %v1854
          %v1863 = vmul.f32 %v1861, %v1855
          %v1864 = vadd.f32 %v1854, %v1862
          %v1865 = vadd.f32 %v1855, %v1863
          %v1866 = vmul.f32 %v1864, 0.7978846
          %v1867 = vmul.f32 %v1865, 0.7978846
          %v1868 = vtanh.pop %v1866
          %v1869 = vtanh.pop %v1867
          %v1870 = vadd.f32 %v1868, 1.0
          %v1871 = vadd.f32 %v1869, 1.0
          %v1872 = vmul.f32 %v1856, %v1870
          %v1873 = vmul.f32 %v1857, %v1871
          %v1874 = vld [vmem:[#allocation18] sm:$0xf]
          %v1875 = vld [vmem:[#allocation18 + $0x4] sm:$0xf]
          %v1876 = vld [vmem:[#allocation18 + $0x8] sm:$0xf]
          %v1877 = vld [vmem:[#allocation18 + $0xc] sm:$0xf]
          %v1878 = vld [vmem:[#allocation18 + $0x10] sm:$0xf]
          %v1879 = vld [vmem:[#allocation18 + $0x14] sm:$0xf]
          %v1880 = vld [vmem:[#allocation18 + $0x18] sm:$0xf]
          %v1881 = vld [vmem:[#allocation18 + $0x1c] sm:$0xf]
          %v1882 = vld [vmem:[#allocation18 + $0x20] sm:$0xf]
          %v1883 = vld [vmem:[#allocation18 + $0x24] sm:$0xf]
          %v1884 = vld [vmem:[#allocation18 + $0x28] sm:$0xf]
          %v1885 = vld [vmem:[#allocation18 + $0x2c] sm:$0xf]
          %v1886 = vld [vmem:[#allocation18 + $0x30] sm:$0xf]
          %v1887 = vld [vmem:[#allocation18 + $0x34] sm:$0xf]
          %v1888 = vld [vmem:[#allocation18 + $0x38] sm:$0xf]
          %v1889 = vld [vmem:[#allocation18 + $0x3c] sm:$0xf]
          %v1890 = vpack.c.bf16 %v1873, %v1872
          %v1891 = vld [vmem:[#allocation19] sm:$0x1]
          %v1893 = vlaneseq
          %v1894 = vshrl.u32 %v1893, 7
          %v1895 = vsub.s32 0, %v1894
          %v1896 = vrot.slane %v1891, %v1895
          %v1914 = vunpack.c.l.b16 %v1874
          %v1915 = vunpack.c.l.b16 %v1875
          %v1916 = vunpack.c.l.b16 %v1876
          %v1917 = vunpack.c.l.b16 %v1877
          %v1918 = vunpack.c.l.b16 %v1878
          %v1919 = vunpack.c.l.b16 %v1879
          %v1920 = vunpack.c.l.b16 %v1880
          %v1921 = vunpack.c.l.b16 %v1881
          %v1922 = vunpack.c.l.b16 %v1882
          %v1923 = vunpack.c.l.b16 %v1883
          %v1924 = vunpack.c.l.b16 %v1884
          %v1925 = vunpack.c.l.b16 %v1885
          %v1926 = vunpack.c.l.b16 %v1886
          %v1927 = vunpack.c.l.b16 %v1887
          %v1928 = vunpack.c.l.b16 %v1888
          %v1929 = vunpack.c.l.b16 %v1889
          %v1930 = vpack.c.b16 %v1915, %v1914
          %v1931 = vpack.c.b16 %v1917, %v1916
          %v1932 = vpack.c.b16 %v1919, %v1918
          %v1933 = vpack.c.b16 %v1921, %v1920
          %v1934 = vpack.c.b16 %v1923, %v1922
          %v1935 = vpack.c.b16 %v1925, %v1924
          %v1936 = vpack.c.b16 %v1927, %v1926
          %v1937 = vpack.c.b16 %v1929, %v1928
          %1946 = vmatprep.subr.bf16.mxu0 0
          %1947 = vmatpush1.bf16.msra.mxu0 %v1930
          %1948 = vmatprep.subr.bf16.mxu0 0
          %1949 = vmatpush1.bf16.msra.mxu0 %v1931
          %1950 = vmatprep.subr.bf16.mxu0 0
          %1951 = vmatpush1.bf16.msra.mxu0 %v1932
          %1952 = vmatprep.subr.bf16.mxu0 0
          %1953 = vmatpush1.bf16.msra.mxu0 %v1933
          %1954 = vmatprep.subr.bf16.mxu0 0
          %1955 = vmatpush1.bf16.msra.mxu0 %v1934
          %1956 = vmatprep.subr.bf16.mxu0 0
          %1957 = vmatpush1.bf16.msra.mxu0 %v1935
          %1958 = vmatprep.subr.bf16.mxu0 0
          %1959 = vmatpush1.bf16.msra.mxu0 %v1936
          %1960 = vmatprep.subr.bf16.mxu0 0
          %1961 = vmatpush1.bf16.msra.mxu0 %v1937
          %1962 = vmatprep.subr.bf16.mxu0 0
          %1963 = vmatpush1.bf16.msra.mxu0 0
          %1964 = vmatprep.subr.bf16.mxu0 0
          %1965 = vmatpush1.bf16.msra.mxu0 0
          %1966 = vmatprep.subr.bf16.mxu0 0
          %1967 = vmatpush1.bf16.msra.mxu0 0
          %1968 = vmatprep.subr.bf16.mxu0 0
          %1969 = vmatpush1.bf16.msra.mxu0 0
          %1970 = vmatprep.subr.bf16.mxu0 0
          %1971 = vmatpush1.bf16.msra.mxu0 0
          %1972 = vmatprep.subr.bf16.mxu0 0
          %1973 = vmatpush1.bf16.msra.mxu0 0
          %1974 = vmatprep.subr.bf16.mxu0 0
          %1975 = vmatpush1.bf16.msra.mxu0 0
          %1976 = vmatprep.subr.bf16.mxu0 0
          %1977 = vmatpush1.bf16.msra.mxu0 0
          %1978 = vmatprep.mubr.bf16.mxu0 0
          %1979 = vmatmul.mubr.bf16.gmra.mrb[0].mxu0 %v1890
          %v1980 = vpop.f32.mrb[0].mxu0
          %v1981 = vadd.f32 %v1896, %v1980
          %v1982 = vpop.f32.mrb[0].mxu0
          %v1983 = vpop.f32.mrb[0].mxu0
          %v1984 = vadd.f32 %v1896, %v1983
          %v1985 = vpop.f32.mrb[0].mxu0
          %1986 = vdwg.mxu0
          %v1987 = vld [vmem:[#allocation6] sm:$0x1]
          %v1989 = vlaneseq
          %v1990 = vshrl.u32 %v1989, 7
          %v1991 = vsub.s32 0, %v1990
          %v1992 = vrot.slane %v1987, %v1991
          %v1994 = vsub.f32 %v1981, %v1992
          %v1995 = vsub.f32 %v1984, %v1992
          %v1996 = vld [vmem:[#allocation7] sm:$0x1]
          %v1998 = vlaneseq
          %v1999 = vshrl.u32 %v1998, 7
          %v2000 = vsub.s32 0, %v1999
          %v2001 = vrot.slane %v1996, %v2000
          %v2003 = vmul.f32 %v1994, %v2001
          %v2004 = vmul.f32 %v1995, %v2001
          %v2005 = vmul.f32 %v2003, 0.5
          %v2006 = vmul.f32 %v2004, 0.5
          %v2007 = vtanh.pop %v2005
          %v2008 = vtanh.pop %v2006
          %v2009 = vadd.f32 %v2007, 1.0
          %v2010 = vadd.f32 %v2008, 1.0
          %v2011 = vmul.f32 %v2009, 0.5
          %v2012 = vmul.f32 %v2010, 0.5
          %2013 = vst [vmem:[%s563] sm:$0xff] %v2011
          %2014 = vst [vmem:[%s563 + $0x8] sm:$0xff] %v2012
          %v2015 = vld [vmem:[#allocation21] sm:$0xf]
          %v2016 = vld [vmem:[#allocation21 + $0x4] sm:$0xf]
          %v2017 = vld [vmem:[#allocation21 + $0x8] sm:$0xf]
          %v2018 = vld [vmem:[#allocation21 + $0xc] sm:$0xf]
          %v2019 = vld [vmem:[#allocation21 + $0x10] sm:$0xf]
          %v2020 = vld [vmem:[#allocation21 + $0x14] sm:$0xf]
          %v2021 = vld [vmem:[#allocation21 + $0x18] sm:$0xf]
          %v2022 = vld [vmem:[#allocation21 + $0x1c] sm:$0xf]
          %v2023 = vld [vmem:[#allocation21 + $0x20] sm:$0xf]
          %v2024 = vld [vmem:[#allocation21 + $0x24] sm:$0xf]
          %v2025 = vld [vmem:[#allocation21 + $0x28] sm:$0xf]
          %v2026 = vld [vmem:[#allocation21 + $0x2c] sm:$0xf]
          %v2027 = vld [vmem:[#allocation21 + $0x30] sm:$0xf]
          %v2028 = vld [vmem:[#allocation21 + $0x34] sm:$0xf]
          %v2029 = vld [vmem:[#allocation21 + $0x38] sm:$0xf]
          %v2030 = vld [vmem:[#allocation21 + $0x3c] sm:$0xf]
          %v2031 = vpack.c.bf16 %v1984, %v1981
          %v2032 = vld [vmem:[#allocation22] sm:$0x1]
          %v2034 = vlaneseq
          %v2035 = vshrl.u32 %v2034, 7
          %v2036 = vsub.s32 0, %v2035
          %v2037 = vrot.slane %v2032, %v2036
          %v2055 = vunpack.c.l.b16 %v2015
          %v2056 = vunpack.c.l.b16 %v2016
          %v2057 = vunpack.c.l.b16 %v2017
          %v2058 = vunpack.c.l.b16 %v2018
          %v2059 = vunpack.c.l.b16 %v2019
          %v2060 = vunpack.c.l.b16 %v2020
          %v2061 = vunpack.c.l.b16 %v2021
          %v2062 = vunpack.c.l.b16 %v2022
          %v2063 = vunpack.c.l.b16 %v2023
          %v2064 = vunpack.c.l.b16 %v2024
          %v2065 = vunpack.c.l.b16 %v2025
          %v2066 = vunpack.c.l.b16 %v2026
          %v2067 = vunpack.c.l.b16 %v2027
          %v2068 = vunpack.c.l.b16 %v2028
          %v2069 = vunpack.c.l.b16 %v2029
          %v2070 = vunpack.c.l.b16 %v2030
          %v2071 = vpack.c.b16 %v2056, %v2055
          %v2072 = vpack.c.b16 %v2058, %v2057
          %v2073 = vpack.c.b16 %v2060, %v2059
          %v2074 = vpack.c.b16 %v2062, %v2061
          %v2075 = vpack.c.b16 %v2064, %v2063
          %v2076 = vpack.c.b16 %v2066, %v2065
          %v2077 = vpack.c.b16 %v2068, %v2067
          %v2078 = vpack.c.b16 %v2070, %v2069
          %2087 = vmatprep.subr.bf16.mxu0 0
          %2088 = vmatpush1.bf16.msra.mxu0 %v2071
          %2089 = vmatprep.subr.bf16.mxu0 0
          %2090 = vmatpush1.bf16.msra.mxu0 %v2072
          %2091 = vmatprep.subr.bf16.mxu0 0
          %2092 = vmatpush1.bf16.msra.mxu0 %v2073
          %2093 = vmatprep.subr.bf16.mxu0 0
          %2094 = vmatpush1.bf16.msra.mxu0 %v2074
          %2095 = vmatprep.subr.bf16.mxu0 0
          %2096 = vmatpush1.bf16.msra.mxu0 %v2075
          %2097 = vmatprep.subr.bf16.mxu0 0
          %2098 = vmatpush1.bf16.msra.mxu0 %v2076
          %2099 = vmatprep.subr.bf16.mxu0 0
          %2100 = vmatpush1.bf16.msra.mxu0 %v2077
          %2101 = vmatprep.subr.bf16.mxu0 0
          %2102 = vmatpush1.bf16.msra.mxu0 %v2078
          %2103 = vmatprep.subr.bf16.mxu0 0
          %2104 = vmatpush1.bf16.msra.mxu0 0
          %2105 = vmatprep.subr.bf16.mxu0 0
          %2106 = vmatpush1.bf16.msra.mxu0 0
          %2107 = vmatprep.subr.bf16.mxu0 0
          %2108 = vmatpush1.bf16.msra.mxu0 0
          %2109 = vmatprep.subr.bf16.mxu0 0
          %2110 = vmatpush1.bf16.msra.mxu0 0
          %2111 = vmatprep.subr.bf16.mxu0 0
          %2112 = vmatpush1.bf16.msra.mxu0 0
          %2113 = vmatprep.subr.bf16.mxu0 0
          %2114 = vmatpush1.bf16.msra.mxu0 0
          %2115 = vmatprep.subr.bf16.mxu0 0
          %2116 = vmatpush1.bf16.msra.mxu0 0
          %2117 = vmatprep.subr.bf16.mxu0 0
          %2118 = vmatpush1.bf16.msra.mxu0 0
          %2119 = vmatprep.mubr.bf16.mxu0 0
          %2120 = vmatmul.mubr.bf16.gmra.mrb[0].mxu0 %v2031
          %v2121 = vpop.f32.mrb[0].mxu0
          %v2122 = vadd.f32 %v2037, %v2121
          %v2123 = vpop.f32.mrb[0].mxu0
          %v2124 = vpop.f32.mrb[0].mxu0
          %v2125 = vadd.f32 %v2037, %v2124
          %v2126 = vpop.f32.mrb[0].mxu0
          %2127 = vdwg.mxu0
          %v2128 = vld [vmem:[#allocation8] sm:$0x1]
          %v2130 = vlaneseq
          %v2131 = vshrl.u32 %v2130, 7
          %v2132 = vsub.s32 0, %v2131
          %v2133 = vrot.slane %v2128, %v2132
          %v2135 = vsub.f32 %v2122, %v2133
          %v2136 = vsub.f32 %v2125, %v2133
          %v2137 = vld [vmem:[#allocation9] sm:$0x1]
          %v2139 = vlaneseq
          %v2140 = vshrl.u32 %v2139, 7
          %v2141 = vsub.s32 0, %v2140
          %v2142 = vrot.slane %v2137, %v2141
          %v2144 = vmul.f32 %v2135, %v2142
          %v2145 = vmul.f32 %v2136, %v2142
          %v2146 = vmul.f32 %v2144, 0.5
          %v2147 = vmul.f32 %v2145, 0.5
          %v2148 = vmul.f32 %v2144, 0.044715
          %v2149 = vmul.f32 %v2145, 0.044715
          %v2150 = vmul.f32 %v2148, %v2144
          %v2151 = vmul.f32 %v2149, %v2145
          %v2152 = vmul.f32 %v2150, %v2144
          %v2153 = vmul.f32 %v2151, %v2145
          %v2154 = vadd.f32 %v2144, %v2152
          %v2155 = vadd.f32 %v2145, %v2153
          %v2156 = vmul.f32 %v2154, 0.7978846
          %v2157 = vmul.f32 %v2155, 0.7978846
          %v2158 = vtanh.pop %v2156
          %v2159 = vtanh.pop %v2157
          %v2160 = vadd.f32 %v2158, 1.0
          %v2161 = vadd.f32 %v2159, 1.0
          %v2162 = vmul.f32 %v2146, %v2160
          %v2163 = vmul.f32 %v2147, %v2161
          %v2164 = vld [vmem:[#allocation24] sm:$0xff]
          %v2165 = vld [vmem:[#allocation24 + $0x8] sm:$0xff]
          %v2166 = vld [vmem:[#allocation24 + $0x10] sm:$0xff]
          %v2167 = vld [vmem:[#allocation24 + $0x18] sm:$0xff]
          %v2168 = vld [vmem:[#allocation24 + $0x20] sm:$0xff]
          %v2169 = vld [vmem:[#allocation24 + $0x28] sm:$0xff]
          %v2170 = vld [vmem:[#allocation24 + $0x30] sm:$0xff]
          %v2171 = vld [vmem:[#allocation24 + $0x38] sm:$0xff]
          %v2172 = vld [vmem:[#allocation24 + $0x40] sm:$0xff]
          %v2173 = vld [vmem:[#allocation24 + $0x48] sm:$0xff]
          %v2174 = vld [vmem:[#allocation24 + $0x50] sm:$0xff]
          %v2175 = vld [vmem:[#allocation24 + $0x58] sm:$0xff]
          %v2176 = vld [vmem:[#allocation24 + $0x60] sm:$0xff]
          %v2177 = vld [vmem:[#allocation24 + $0x68] sm:$0xff]
          %v2178 = vld [vmem:[#allocation24 + $0x70] sm:$0xff]
          %v2179 = vld [vmem:[#allocation24 + $0x78] sm:$0xff]
          %v2180 = vpack.c.bf16 %v2163, %v2162
          %v2181 = vld [vmem:[#allocation25] sm:$0x3]
          %v2183 = vlaneseq
          %v2184 = vshrl.u32 %v2183, 7
          %v2185 = vsub.s32 0, %v2184
          %v2186 = vrot.slane %v2181, %v2185
          %v2187 = vlaneseq
          %v2188 = vshrl.u32 %v2187, 7
          %v2189 = vsub.s32 1, %v2188
          %v2190 = vrot.slane %v2181, %v2189
          %v2209 = vunpack.c.l.b16 %v2164
          %v2210 = vunpack.c.h.b16 %v2164
          %v2211 = vunpack.c.l.b16 %v2165
          %v2212 = vunpack.c.h.b16 %v2165
          %v2213 = vunpack.c.l.b16 %v2166
          %v2214 = vunpack.c.h.b16 %v2166
          %v2215 = vunpack.c.l.b16 %v2167
          %v2216 = vunpack.c.h.b16 %v2167
          %v2217 = vunpack.c.l.b16 %v2168
          %v2218 = vunpack.c.h.b16 %v2168
          %v2219 = vunpack.c.l.b16 %v2169
          %v2220 = vunpack.c.h.b16 %v2169
          %v2221 = vunpack.c.l.b16 %v2170
          %v2222 = vunpack.c.h.b16 %v2170
          %v2223 = vunpack.c.l.b16 %v2171
          %v2224 = vunpack.c.h.b16 %v2171
          %v2225 = vunpack.c.l.b16 %v2172
          %v2226 = vunpack.c.h.b16 %v2172
          %v2227 = vunpack.c.l.b16 %v2173
          %v2228 = vunpack.c.h.b16 %v2173
          %v2229 = vunpack.c.l.b16 %v2174
          %v2230 = vunpack.c.h.b16 %v2174
          %v2231 = vunpack.c.l.b16 %v2175
          %v2232 = vunpack.c.h.b16 %v2175
          %v2233 = vunpack.c.l.b16 %v2176
          %v2234 = vunpack.c.h.b16 %v2176
          %v2235 = vunpack.c.l.b16 %v2177
          %v2236 = vunpack.c.h.b16 %v2177
          %v2237 = vunpack.c.l.b16 %v2178
          %v2238 = vunpack.c.h.b16 %v2178
          %v2239 = vunpack.c.l.b16 %v2179
          %v2240 = vunpack.c.h.b16 %v2179
          %v2241 = vpack.c.b16 %v2211, %v2209
          %v2242 = vpack.c.b16 %v2212, %v2210
          %v2243 = vpack.c.b16 %v2215, %v2213
          %v2244 = vpack.c.b16 %v2216, %v2214
          %v2245 = vpack.c.b16 %v2219, %v2217
          %v2246 = vpack.c.b16 %v2220, %v2218
          %v2247 = vpack.c.b16 %v2223, %v2221
          %v2248 = vpack.c.b16 %v2224, %v2222
          %v2249 = vpack.c.b16 %v2227, %v2225
          %v2250 = vpack.c.b16 %v2228, %v2226
          %v2251 = vpack.c.b16 %v2231, %v2229
          %v2252 = vpack.c.b16 %v2232, %v2230
          %v2253 = vpack.c.b16 %v2235, %v2233
          %v2254 = vpack.c.b16 %v2236, %v2234
          %v2255 = vpack.c.b16 %v2239, %v2237
          %v2256 = vpack.c.b16 %v2240, %v2238
          %2273 = vmatprep.subr.bf16.mxu0 %v2242
          %2274 = vmatpush1.bf16.msra.mxu0 %v2241
          %2275 = vmatprep.subr.bf16.mxu0 %v2244
          %2276 = vmatpush1.bf16.msra.mxu0 %v2243
          %2277 = vmatprep.subr.bf16.mxu0 %v2246
          %2278 = vmatpush1.bf16.msra.mxu0 %v2245
          %2279 = vmatprep.subr.bf16.mxu0 %v2248
          %2280 = vmatpush1.bf16.msra.mxu0 %v2247
          %2281 = vmatprep.subr.bf16.mxu0 %v2250
          %2282 = vmatpush1.bf16.msra.mxu0 %v2249
          %2283 = vmatprep.subr.bf16.mxu0 %v2252
          %2284 = vmatpush1.bf16.msra.mxu0 %v2251
          %2285 = vmatprep.subr.bf16.mxu0 %v2254
          %2286 = vmatpush1.bf16.msra.mxu0 %v2253
          %2287 = vmatprep.subr.bf16.mxu0 %v2256
          %2288 = vmatpush1.bf16.msra.mxu0 %v2255
          %2289 = vmatprep.subr.bf16.mxu0 0
          %2290 = vmatpush1.bf16.msra.mxu0 0
          %2291 = vmatprep.subr.bf16.mxu0 0
          %2292 = vmatpush1.bf16.msra.mxu0 0
          %2293 = vmatprep.subr.bf16.mxu0 0
          %2294 = vmatpush1.bf16.msra.mxu0 0
          %2295 = vmatprep.subr.bf16.mxu0 0
          %2296 = vmatpush1.bf16.msra.mxu0 0
          %2297 = vmatprep.subr.bf16.mxu0 0
          %2298 = vmatpush1.bf16.msra.mxu0 0
          %2299 = vmatprep.subr.bf16.mxu0 0
          %2300 = vmatpush1.bf16.msra.mxu0 0
          %2301 = vmatprep.subr.bf16.mxu0 0
          %2302 = vmatpush1.bf16.msra.mxu0 0
          %2303 = vmatprep.subr.bf16.mxu0 0
          %2304 = vmatpush1.bf16.msra.mxu0 0
          %2305 = vmatprep.mubr.bf16.mxu0 0
          %2306 = vmatmul.mubr.bf16.gmra.mrb[0].mxu0 %v2180
          %v2307 = vpop.f32.mrb[0].mxu0
          %v2308 = vadd.f32 %v2186, %v2307
          %v2309 = vpop.f32.mrb[0].mxu0
          %v2310 = vadd.f32 %v2190, %v2309
          %v2311 = vpop.f32.mrb[0].mxu0
          %v2312 = vadd.f32 %v2186, %v2311
          %v2313 = vpop.f32.mrb[0].mxu0
          %v2314 = vadd.f32 %v2190, %v2313
          %2315 = vdwg.mxu0
          %v2316 = vld [vmem:[%s481] sm:$0xff]
          %v2317 = vld [vmem:[%s481 + $0x8] sm:$0xff]
          %v2318 = vld [vmem:[%s481 + $0x10] sm:$0xff]
          %v2319 = vld [vmem:[%s481 + $0x18] sm:$0xff]
          %v2320 = vsub.f32 %v2308, %v2316
          %v2321 = vsub.f32 %v2310, %v2317
          %v2322 = vsub.f32 %v2312, %v2318
          %v2323 = vsub.f32 %v2314, %v2319
          %v2324 = vmul.f32 %v2320, %v2320
          %v2325 = vmul.f32 %v2321, %v2321
          %v2326 = vmul.f32 %v2322, %v2322
          %v2327 = vmul.f32 %v2323, %v2323
          %v2328 = vadd.f32 %v2324, %v2325
          %2329 = vadd.xlane.f32.xlu0 %v2328
          %v2330 = vpop.xlane.xlu0 %2329
          %v2331 = vadd.f32 %v2326, %v2327
          %2332 = vadd.xlane.f32.xlu0 %v2331
          %v2333 = vpop.xlane.xlu0 %2332
          %v2334 = vadd.f32 %v2330, %v2333
          %v2335 = vrot.slane %v2334, 4
          %v2336 = vadd.f32 %v2334, %v2335
          %v2337 = vrot.slane %v2336, 2
          %v2338 = vadd.f32 %v2336, %v2337
          %v2339 = vrot.slane %v2338, 1
          %v2340 = vadd.f32 %v2338, %v2339
          %v2341 = vmul.f32 %v2340, 6.1035156e-05
          %v2342 = vld [vmem:[#allocation28] sm:$0x1]
          %s2343 = scalar_select %p571, 1, 0
          %v2344 = vstv %s2343
          %vm2345 = vcmp.eq.s32.totalorder %v2344, 1
          %v2346 = vsel %vm2345, 0.0, %v2342
          %v2347 = vadd.f32 %v2346, %v2341
          %vm2348 = vcmask 0
          %2349 = vst.msk [vmem:[#allocation28] sm:$0x1] %vm2348, %v2347
        $region128: #{tpu_custom_call.1} parent=59 // pred_fallthru
          _
        %s2350 = sand.u32 %s277, 1
        %s2351 = scalar_lea.sflag [#allocation12], %s2350
        %s2352 = sand.u32 %s277, 1
        %s2353 = smul.addr %s2352, 16
        %s2354 = scalar_lea.vmem [#allocation27], %s2353
        // Predicated region
        $region129: #{tpu_custom_call.1} parent=59 // pred_check
          %p2355 = pneg %p287
        $region130: #{tpu_custom_call.1} parent=59 // pred_check_branch
          %2357 = sbr.rel (%p2355) target = $region132
        $region131: #{tpu_custom_call.1} parent=59 // pred_region
          %s2358 = smul.u32 2, %s42
          %s2360 = ssub.s32 256, 256
          %2361 = vsyncadd %s2351, %s2360
          %s2362 = smul.addr %s2358, 128
          %s2363 = scalar_lea.hbm %s10, %s2362
          %s2364 = sshll.u32 %s2354, 4
          %s2365 = int_to_ptr.vmem [resolvable:$true] %s2364
          %2370 = dma.vmem_to_hbm [thread:$0]  %s2365, 256, %s2363, %s2351, 128, 128, 8
        $region132: #{tpu_custom_call.1} parent=59 // pred_fallthru
          _
        // Predicated region
        $region133: #{tpu_custom_call.1} parent=59 // pred_check
          %p2371 = pneg %p308
        $region134: #{tpu_custom_call.1} parent=59 // pred_check_branch
          %2373 = sbr.rel (%p2371) target = $region136
        $region135: #{tpu_custom_call.1} parent=59 // pred_region
          %s2375 = ssub.s32 16, 16
          %2376 = vsyncadd [#allocation29], %s2375
          %s2378 = sshll.u32 [#allocation28], 4
          %s2379 = int_to_ptr.vmem [resolvable:$true] %s2378
          %2381 = dma.vmem_to_hbm [thread:$0]  %s2379, 16, %s11, [#allocation29]
        $region136: #{tpu_custom_call.1} parent=59 // pred_fallthru
          _
        // Predicated region
        $region137: #{tpu_custom_call.1} parent=59 // pred_check
          %p2382 = pneg %p308
        $region138: #{tpu_custom_call.1} parent=59 // pred_check_branch
          %2384 = sbr.rel (%p2382) target = $region140
        $region139: #{tpu_custom_call.1} parent=59 // pred_region
          %2385 = dma.done [#allocation29], 16
        $region140: #{tpu_custom_call.1} parent=59 // pred_fallthru
          _
      $region60: #{tpu_custom_call.1} parent=5 // pred_fallthru
        _
      %p2386 = scmp.le.s32.totalorder 2, %s32
      // Predicated region
      $region141: #{tpu_custom_call.1} parent=5 // pred_check
        %p2387 = pneg %p2386
      $region142: #{tpu_custom_call.1} parent=5 // pred_check_branch
        %2389 = sbr.rel (%p2387) target = $region144
      $region143: #{tpu_custom_call.1} parent=5 // pred_region
        %s2390 = ssub.s32 %s32, 2
        // Predicated region
        $region145: #{tpu_custom_call.1} parent=143 // pred_check
          %p2391 = pneg %p293
        $region146: #{tpu_custom_call.1} parent=143 // pred_check_branch
          %2393 = sbr.rel (%p2391) target = $region148
        $region147: #{tpu_custom_call.1} parent=143 // pred_region
          %s2394 = sand.u32 %s278, 1
          %s2395 = scalar_lea.sflag [#allocation12], %s2394
          %s2396 = sand.u32 %s278, 1
          %s2397 = smul.addr %s2396, 16
          %s2398 = scalar_lea.vmem [#allocation27], %s2397
          %2399 = dma.done %s2395, 256
        $region148: #{tpu_custom_call.1} parent=143 // pred_fallthru
          _
      $region144: #{tpu_custom_call.1} parent=5 // pred_fallthru
        _
    $region6: #{tpu_custom_call.1} parent=1 // loop_footer
      %s36 = sadd.s32 1, %s32
    $region7: #{tpu_custom_call.1} parent=1 // loop_footer_branch
      %31 = sbr.rel target = $region3
    $region8: #{tpu_custom_call.1} parent=1 // loop_exit
      _
    %2400 = vsyncpa [#allocation11], 1
    %s2401 = scalar_lea.sflag [#allocation11], 1
    %2402 = vsyncpa %s2401, 1
    %2403 = vsyncpa [#allocation14], 1
    %s2404 = scalar_lea.sflag [#allocation14], 1
    %2405 = vsyncpa %s2404, 1
    %2406 = vsyncpa [#allocation17], 1
    %2407 = vsyncpa [#allocation20], 1
    %2408 = vsyncpa [#allocation23], 1
    %2409 = vsyncpa [#allocation26], 1
    %2410 = vsyncpa [#allocation12], 1
    %s2411 = scalar_lea.sflag [#allocation12], 1
    %2412 = vsyncpa %s2411, 1
    %2413 = vsyncpa [#allocation29], 1

</llo_original>
